<compile_context>
chip_gen: v6e
topology: v6e:2x2x1
jax: 0.10.0
libtpu: 0.0.40
codegen_flags: <defaults>
</compile_context>

<pallas_src>
import math

import jax
import jax.numpy as jnp
from jax.experimental import pallas as pl
from jax.experimental.pallas import tpu as pltpu

EPS = 1e-8
_LANE = 128
_SUBLANE = 8


# ----------------------------------------------------------------------------
# Helpers: tiling / VMEM sizing
# ----------------------------------------------------------------------------
def _round_up(x, m):
    return ((x + m - 1) // m) * m


def _vmem_capacity_bytes():
    try:
        return int(pltpu.get_tpu_info().vmem_capacity_bytes)
    except Exception:
        return 64 * 1024 * 1024  # conservative (v7x has 64 MiB per TC)


def _choose_l_tile(L, Np, itemsize):
    # ~2 MiB blocks on 64 MiB-VMEM chips (v7x), ~4 MiB on 128 MiB chips
    # (v5e/v6e) — big enough for the measured ~85% HBM-roofline regime.
    target_bytes = 4 * 1024 * 1024 if _vmem_capacity_bytes() >= 100 * 1024 * 1024 \
        else 2 * 1024 * 1024
    rows = max(_SUBLANE, target_bytes // max(1, Np * itemsize))
    rows = max(_SUBLANE, (rows // _SUBLANE) * _SUBLANE)
    return min(rows, _round_up(L, _SUBLANE))


def _l_tile_for(L, Np, itemsize, l_tile):
    if l_tile is None:
        l_tile = _choose_l_tile(L, Np, itemsize)
    lt = min(int(l_tile), _round_up(L, _SUBLANE))
    return max(_SUBLANE, (lt // _SUBLANE) * _SUBLANE)


def _compiler_params(dimension_semantics, working_set_bytes):
    # Explicit budget: double-buffered streaming blocks + headroom, capped so
    # the same kernels also fit v7x's 64 MiB physical VMEM.
    limit = int(min(32 * 1024 * 1024,
                    max(16 * 1024 * 1024, 2 * working_set_bytes + 4 * 1024 * 1024)))
    return pltpu.CompilerParams(
        dimension_semantics=dimension_semantics,
        vmem_limit_bytes=limit,
    )


# ----------------------------------------------------------------------------
# Pallas kernels (channel-last [.., L_TILE, Np] blocks, N on the lane axis)
# ----------------------------------------------------------------------------
def _add_pe_kernel(x_ref, pe_ref, o_ref):
    # x_ref / o_ref: [1, L_TILE, Np]; pe_ref: [L_TILE, Np] (resident across B).
    o_ref[0] = (x_ref[0].astype(jnp.float32)
                + pe_ref[...].astype(jnp.float32)).astype(o_ref.dtype)


def _gn_stats_kernel(x_ref, sum_ref, ssq_ref, acc_s, acc_q):
    # Pass 1 of GroupNorm(num_groups=1): single-sweep per-batch partial sum and
    # sum-of-squares, reduced over the L tile (kept per-lane; the tiny final
    # reduction over N happens in the wrapper).  Grid: (B "parallel",
    # L-tiles "arbitrary").
    l = pl.program_id(1)

    @pl.when(l == 0)
    def _():
        acc_s[...] = jnp.zeros_like(acc_s)
        acc_q[...] = jnp.zeros_like(acc_q)

    x = x_ref[0].astype(jnp.float32)                       # [L_TILE, Np]
    acc_s[...] += jnp.sum(x, axis=0, keepdims=True)
    acc_q[...] += jnp.sum(x * x, axis=0, keepdims=True)

    @pl.when(l == pl.num_programs(1) - 1)
    def _():
        sum_ref[0] = acc_s[...]
        ssq_ref[0] = acc_q[...]


def _gn_apply_kernel(y_ref, skip_ref, w_ref, b_ref, mean_ref, rstd_ref, o_ref):
    # Pass 2: purely elementwise normalize + per-channel affine + residual add.
    # y/skip/o: [1, L_TILE, Np]; w/b: [1, Np]; mean/rstd: [1, 1, 1] per batch.
    y = y_ref[0].astype(jnp.float32)                       # [L_TILE, Np]
    mean = mean_ref[0]                                     # (1, 1), broadcast
    rstd = rstd_ref[0]                                     # (1, 1), broadcast
    out = (y - mean) * rstd * w_ref[...] + b_ref[...] \
        + skip_ref[0].astype(jnp.float32)
    o_ref[0] = out.astype(o_ref.dtype)


# ----------------------------------------------------------------------------
# Pallas wrappers
# ----------------------------------------------------------------------------
def add_pe(x, pe, *, l_tile=None):
    """x: [B, L, N], pe: [L, N] -> x + pe (broadcast over B), channel-last."""
    B, L, N = x.shape
    itemsize = jnp.dtype(x.dtype).itemsize
    Np = _round_up(N, _LANE)
    lt = _l_tile_for(L, Np, itemsize, l_tile)
    Lp = _round_up(L, lt)
    nl = Lp // lt

    xp = jnp.pad(x, ((0, 0), (0, Lp - L), (0, Np - N)))
    pep = jnp.pad(pe.astype(x.dtype), ((0, Lp - L), (0, Np - N)))

    blk = lt * Np * itemsize
    out = pl.pallas_call(
        _add_pe_kernel,
        out_shape=jax.ShapeDtypeStruct((B, Lp, Np), x.dtype),
        grid_spec=pltpu.PrefetchScalarGridSpec(
            num_scalar_prefetch=0,
            # B innermost: pe's block index is independent of b, so the pe tile
            # stays resident in VMEM across the inner batch sweep (no refetch).
            grid=(nl, B),
            in_specs=[
                pl.BlockSpec((1, lt, Np), lambda l, b: (b, l, 0)),
                pl.BlockSpec((lt, Np), lambda l, b: (l, 0)),
            ],
            out_specs=pl.BlockSpec((1, lt, Np), lambda l, b: (b, l, 0)),
        ),
        compiler_params=_compiler_params(("parallel", "parallel"), 3 * blk),
        cost_estimate=pl.CostEstimate(
            flops=int(B * Lp * Np), transcendentals=0,
            bytes_accessed=int((2 * B * Lp * Np + Lp * Np) * itemsize)),
    )(xp, pep)
    return out[:, :L, :N]


def group_norm_skip(y, skip, w, b, eps=EPS, *, l_tile=None):
    """Fused GroupNorm(1, N, eps)(y) * w + b + skip on channel-last [B, L, N].

    Two Pallas passes: (1) per-batch sum / sum-of-squares with the L axis as an
    'arbitrary' reduction grid axis; (2) fully parallel elementwise
    normalize + affine + residual add.
    """
    B, L, N = y.shape
    itemsize = jnp.dtype(y.dtype).itemsize
    Np = _round_up(N, _LANE)
    lt = _l_tile_for(L, Np, itemsize, l_tile)
    Lp = _round_up(L, lt)
    nl = Lp // lt

    yp = jnp.pad(y, ((0, 0), (0, Lp - L), (0, Np - N)))
    sp = jnp.pad(skip, ((0, 0), (0, Lp - L), (0, Np - N)))
    wp = jnp.pad(w.astype(jnp.float32), (0, Np - N)).reshape(1, Np)
    bp = jnp.pad(b.astype(jnp.float32), (0, Np - N)).reshape(1, Np)

    blk = lt * Np * itemsize

    # ---- pass 1: per-batch per-lane partial sums (single sweep over y) ----
    lane_sum, lane_ssq = pl.pallas_call(
        _gn_stats_kernel,
        out_shape=(jax.ShapeDtypeStruct((B, 1, Np), jnp.float32),
                   jax.ShapeDtypeStruct((B, 1, Np), jnp.float32)),
        grid_spec=pltpu.PrefetchScalarGridSpec(
            num_scalar_prefetch=0,
            grid=(B, nl),
            in_specs=[pl.BlockSpec((1, lt, Np), lambda b_, l: (b_, l, 0))],
            out_specs=(pl.BlockSpec((1, 1, Np), lambda b_, l: (b_, 0, 0)),
                       pl.BlockSpec((1, 1, Np), lambda b_, l: (b_, 0, 0))),
            scratch_shapes=[pltpu.VMEM((1, Np), jnp.float32),
                            pltpu.VMEM((1, Np), jnp.float32)],
        ),
        compiler_params=_compiler_params(("parallel", "arbitrary"), 2 * blk),
        cost_estimate=pl.CostEstimate(
            flops=int(3 * B * Lp * Np), transcendentals=0,
            bytes_accessed=int(B * Lp * Np * itemsize)),
    )(yp)

    # Tiny per-batch finalize (B x Np -> B scalars) in plain JAX; zero-padded
    # rows/lanes contribute nothing, so divide by the true element count.
    # Single-sweep var = E[x^2] - E[x]^2, accumulated in f32.
    cnt = jnp.float32(N * L)
    tot = jnp.sum(lane_sum.reshape(B, Np), axis=1)
    tot2 = jnp.sum(lane_ssq.reshape(B, Np), axis=1)
    mean = tot / cnt
    var = jnp.maximum(tot2 / cnt - mean * mean, 0.0)
    rstd = jax.lax.rsqrt(var + jnp.float32(eps))
    mean3 = mean.reshape(B, 1, 1).astype(jnp.float32)
    rstd3 = rstd.reshape(B, 1, 1).astype(jnp.float32)

    # ---- pass 2: elementwise normalize + affine + skip (all parallel) ----
    out = pl.pallas_call(
        _gn_apply_kernel,
        out_shape=jax.ShapeDtypeStruct((B, Lp, Np), y.dtype),
        grid_spec=pltpu.PrefetchScalarGridSpec(
            num_scalar_prefetch=0,
            grid=(B, nl),
            in_specs=[
                pl.BlockSpec((1, lt, Np), lambda b_, l: (b_, l, 0)),  # y
                pl.BlockSpec((1, lt, Np), lambda b_, l: (b_, l, 0)),  # skip
                pl.BlockSpec((1, Np), lambda b_, l: (0, 0)),          # gamma
                pl.BlockSpec((1, Np), lambda b_, l: (0, 0)),          # beta
                pl.BlockSpec((1, 1, 1), lambda b_, l: (b_, 0, 0)),    # mean
                pl.BlockSpec((1, 1, 1), lambda b_, l: (b_, 0, 0)),    # rstd
            ],
            out_specs=pl.BlockSpec((1, lt, Np), lambda b_, l: (b_, l, 0)),
        ),
        compiler_params=_compiler_params(("parallel", "parallel"), 3 * blk),
        cost_estimate=pl.CostEstimate(
            flops=int(5 * B * Lp * Np), transcendentals=0,
            bytes_accessed=int(3 * B * Lp * Np * itemsize)),
    )(yp, sp, wp, bp, mean3, rstd3)
    return out[:, :L, :N]


# ----------------------------------------------------------------------------
# Positional encoding (PositionalEncodingPermute2D) — batch-invariant;
# channel count follows the input tensor (orig_ch = N), matching the package.
# Returned in [K, S, N] (channel-last) layout.
# ----------------------------------------------------------------------------
def positional_encoding_2d(N, K, S, pe_channels=256, dtype=jnp.float32):
    ch = int(math.ceil(pe_channels / 4) * 2)                          # 128
    inv_freq = 1.0 / (10000.0 ** (jnp.arange(0, ch, 2, dtype=jnp.float32) / ch))
    ang_k = jnp.arange(K, dtype=jnp.float32)[:, None] * inv_freq[None]
    ang_s = jnp.arange(S, dtype=jnp.float32)[:, None] * inv_freq[None]
    emb_k = jnp.stack([jnp.sin(ang_k), jnp.cos(ang_k)], axis=-1).reshape(K, ch)
    emb_s = jnp.stack([jnp.sin(ang_s), jnp.cos(ang_s)], axis=-1).reshape(S, ch)
    emb = jnp.zeros((K, S, 2 * ch), dtype=jnp.float32)
    emb = emb.at[:, :, :ch].set(jnp.broadcast_to(emb_k[:, None, :], (K, S, ch)))
    emb = emb.at[:, :, ch:].set(jnp.broadcast_to(emb_s[None, :, :], (K, S, ch)))
    return emb[:, :, :N].astype(dtype)                                # [K, S, N]


# ----------------------------------------------------------------------------
# Cross_Dual_Computation_Block forward
# ----------------------------------------------------------------------------
def cross_dual_computation_block(x, v, params, eps=EPS, *, l_tile=None):
    """x: [B, N, K, S], v: [B, N, S] -> [B, N, K, S]."""
    B, N, K, S = x.shape
    L = K * S
    pe_ksn = positional_encoding_2d(N, K, S, dtype=x.dtype)           # [K, S, N]
    pe_skn = jnp.transpose(pe_ksn, (1, 0, 2)).reshape(L, N)           # [S*K, N]

    # Single transpose into channel-last; it feeds the PE add, the intra_mdl
    # input, and the intra skip (no transposes around the norms afterwards).
    x_skn = jnp.transpose(x, (0, 3, 2, 1)).reshape(B, L, N)           # [B, S*K, N]
    x_pe = add_pe(x_skn, pe_skn, l_tile=l_tile)                       # [B, S*K, N]

    # ---------------- intra (within-chunk) path ----------------
    intra_in = x_pe.reshape(B * S, K, N)
    # TODO(synk): intra_mdl is an injected transformer block (SBTransformerBlock);
    # stand-in: per-position Linear(N, N).  Once the real module is ported, fuse
    # its NxN GEMM + bias with the norm pass-1 statistics in one Pallas pipeline.
    intra_seq = intra_in @ params["intra_w"] + params["intra_b"]
    # intra = intra_norm(intra) + x, computed in the layout the matmul produced
    # (GroupNorm(1) statistics are layout-invariant per batch).
    intra = group_norm_skip(intra_seq.reshape(B, L, N), x_pe,
                            params["gn_intra_w"], params["gn_intra_b"], eps,
                            l_tile=l_tile)                            # [B, S*K, N]

    # ---------------- inter (cross-chunk, audio-visual) path ----------------
    intra_ksn = jnp.transpose(intra.reshape(B, S, K, N), (0, 2, 1, 3))  # [B,K,S,N]
    inter_in = intra_ksn.reshape(B * K, S, N)
    v_sn = jnp.transpose(v, (0, 2, 1)) + pe_ksn[K // 2][None]           # [B, S, N]
    v_in = jnp.broadcast_to(v_sn[:, None], (B, K, S, N)).reshape(B * K, S, N)
    # TODO(synk): inter_mdl is an injected cross-attention sub-module; stand-in
    # here is a deterministic linear fusion of the audio and visual streams.
    inter_seq = (inter_in @ params["inter_wx"] + v_in @ params["inter_wv"]
                 + params["inter_b"])
    # out = inter_norm(inter) + intra, again directly in channel-last layout.
    out_ksn = group_norm_skip(inter_seq.reshape(B, L, N),
                              intra_ksn.reshape(B, L, N),
                              params["gn_inter_w"], params["gn_inter_b"], eps,
                              l_tile=l_tile)                          # [B, K*S, N]
    return jnp.transpose(out_ksn.reshape(B, K, S, N), (0, 3, 1, 2))   # [B, N, K, S]


# ----------------------------------------------------------------------------
# Pure-JAX reference (mirrors the PyTorch module op-for-op) for validation
# ----------------------------------------------------------------------------
def _group_norm1(x, w, b, eps):
    mean = jnp.mean(x, axis=(1, 2, 3), keepdims=True)
    var = jnp.mean((x - mean) ** 2, axis=(1, 2, 3), keepdims=True)
    y = (x - mean) / jnp.sqrt(var + eps)
    return y * w[None, :, None, None] + b[None, :, None, None]


def reference_forward(x, v, params, eps=EPS):
    B, N, K, S = x.shape
    pe = jnp.transpose(positional_encoding_2d(N, K, S), (2, 0, 1))    # [N, K, S]
    x = x + pe[None]
    intra = jnp.transpose(x, (0, 3, 2, 1)).reshape(B * S, K, N)
    intra = intra @ params["intra_w"] + params["intra_b"]
    intra = jnp.transpose(intra.reshape(B, S, K, N), (0, 3, 2, 1))
    intra = _group_norm1(intra, params["gn_intra_w"], params["gn_intra_b"], eps)
    intra = intra + x
    inter = jnp.transpose(intra, (0, 2, 3, 1)).reshape(B * K, S, N)
    v2 = v + pe[:, K // 2, :][None]
    vr = jnp.broadcast_to(v2[:, :, None, :], (B, N, K, S))
    vr = jnp.transpose(vr, (0, 2, 3, 1)).reshape(B * K, S, N)
    inter = inter @ params["inter_wx"] + vr @ params["inter_wv"] + params["inter_b"]
    inter = jnp.transpose(inter.reshape(B, K, S, N), (0, 3, 1, 2))
    inter = _group_norm1(inter, params["gn_inter_w"], params["gn_inter_b"], eps)
    return inter + intra


if __name__ == "__main__":
    # Small shapes consistent with the module: x [B, N, K, S], v [B, N, S].
    # K*S = 160 and N = 64 deliberately exercise L-tiling (l_tile=64 -> 3 tiles)
    # plus L- and N(lane)-padding inside the Pallas wrappers.
    B, N, K, S = 2, 64, 16, 10

    keys = jax.random.split(jax.random.PRNGKey(0), 10)
    x = jax.random.normal(keys[0], (B, N, K, S), dtype=jnp.float32)
    v = jax.random.normal(keys[1], (B, N, S), dtype=jnp.float32)
    params = {
        # stand-ins for the injected intra_mdl / inter_mdl
        "intra_w": 0.1 * jax.random.normal(keys[2], (N, N), jnp.float32),
        "intra_b": 0.1 * jax.random.normal(keys[3], (N,), jnp.float32),
        "inter_wx": 0.1 * jax.random.normal(keys[4], (N, N), jnp.float32),
        "inter_wv": 0.1 * jax.random.normal(keys[5], (N, N), jnp.float32),
        "inter_b": 0.1 * jax.random.normal(keys[6], (N,), jnp.float32),
        # GroupNorm(1, N, eps=1e-8) affine parameters (intra_norm / inter_norm)
        "gn_intra_w": 1.0 + 0.1 * jax.random.normal(keys[7], (N,), jnp.float32),
        "gn_intra_b": 0.1 * jax.random.normal(keys[8], (N,), jnp.float32),
        "gn_inter_w": 1.0 + 0.1 * jax.random.normal(keys[9], (N,), jnp.float32),
        "gn_inter_b": jnp.zeros((N,), jnp.float32),
    }

    fwd = jax.jit(lambda xx, vv, pp: cross_dual_computation_block(
        xx, vv, pp, l_tile=64))
    out = jax.block_until_ready(fwd(x, v, params))

    ref = reference_forward(x, v, params)
    assert out.shape == (B, N, K, S)
    max_err = float(jnp.max(jnp.abs(out - ref)))
    assert jnp.allclose(out, ref, atol=1e-4, rtol=1e-4), max_err

    print("KERNEL_OK")
</pallas_src>

<mosaic_0001>
module attributes {stable_mosaic.version = 11 : i64} {
  func.func @_add_pe_kernel(%arg0: i32, %arg1: i32, %arg2: memref<1x64x128xf32, #tpu.memory_space<vmem>>, %arg3: memref<64x128xf32, #tpu.memory_space<vmem>>, %arg4: memref<1x64x128xf32, #tpu.memory_space<vmem>>) attributes {dimension_semantics = [#tpu.dimension_semantics<parallel>, #tpu.dimension_semantics<parallel>], iteration_bounds = array<i64: 3, 2>, scalar_prefetch = 0 : i64, scratch_operands = 0 : i64, tpu.core_type = #tpu.core_type<tc>, window_params = [{transform_indices = @transform_0, window_bounds = array<i64: 1, 64, 128>}, {transform_indices = @transform_1, window_bounds = array<i64: 64, 128>}, {transform_indices = @transform_2, window_bounds = array<i64: 1, 64, 128>}]} {
    %c0 = arith.constant 0 : index
    %c0_0 = arith.constant 0 : index
    %c0_1 = arith.constant 0 : index
    %0 = vector.load %arg2[%c0, %c0_0, %c0_1] : memref<1x64x128xf32, #tpu.memory_space<vmem>>, vector<1x64x128xf32>
    %1 = vector.shape_cast %0 : vector<1x64x128xf32> to vector<64x128xf32>
    %c0_2 = arith.constant 0 : index
    %c0_3 = arith.constant 0 : index
    %2 = vector.load %arg3[%c0_2, %c0_3] : memref<64x128xf32, #tpu.memory_space<vmem>>, vector<64x128xf32>
    %3 = arith.addf %1, %2 : vector<64x128xf32>
    %c0_4 = arith.constant 0 : index
    %c0_5 = arith.constant 0 : index
    %c0_6 = arith.constant 0 : index
    %4 = vector.load %arg4[%c0_4, %c0_5, %c0_6] : memref<1x64x128xf32, #tpu.memory_space<vmem>>, vector<1x64x128xf32>
    %5 = vector.shape_cast %4 : vector<1x64x128xf32> to vector<64x128xf32>
    %6 = vector.shape_cast %3 : vector<64x128xf32> to vector<1x64x128xf32>
    tpu.vector_store %arg4[%c0_4, %c0_5, %c0_6], %6 {strides = array<i32>} : memref<1x64x128xf32, #tpu.memory_space<vmem>>, vector<1x64x128xf32>,
    return
  }
  func.func @transform_0(%arg0: i32, %arg1: i32) -> (i32, i32, i32) {
    %c0_i32 = arith.constant 0 : i32
    %c0_i32_0 = arith.constant 0 : i32
    return %arg1, %arg0, %c0_i32 : i32, i32, i32
  }
  func.func @transform_1(%arg0: i32, %arg1: i32) -> (i32, i32) {
    %c0_i32 = arith.constant 0 : i32
    %c0_i32_0 = arith.constant 0 : i32
    return %arg0, %c0_i32 : i32, i32
  }
  func.func @transform_2(%arg0: i32, %arg1: i32) -> (i32, i32, i32) {
    %c0_i32 = arith.constant 0 : i32
    %c0_i32_0 = arith.constant 0 : i32
    return %arg1, %arg0, %c0_i32 : i32, i32, i32
  }
}

module attributes {stable_mosaic.version = 11 : i64} {
  func.func @_gn_stats_kernel(%arg0: i32, %arg1: i32, %arg2: memref<1x64x128xf32, #tpu.memory_space<vmem>>, %arg3: memref<1x1x128xf32, #tpu.memory_space<vmem>>, %arg4: memref<1x1x128xf32, #tpu.memory_space<vmem>>, %arg5: memref<1x128xf32, #tpu.memory_space<vmem>>, %arg6: memref<1x128xf32, #tpu.memory_space<vmem>>) attributes {dimension_semantics = [#tpu.dimension_semantics<parallel>, #tpu.dimension_semantics<arbitrary>], iteration_bounds = array<i64: 2, 3>, scalar_prefetch = 0 : i64, scratch_operands = 2 : i64, tpu.core_type = #tpu.core_type<tc>, window_params = [{transform_indices = @transform_0, window_bounds = array<i64: 1, 64, 128>}, {transform_indices = @transform_1, window_bounds = array<i64: 1, 1, 128>}, {transform_indices = @transform_2, window_bounds = array<i64: 1, 1, 128>}]} {
    %c0_i32 = arith.constant 0 : i32
    %0 = arith.cmpi eq, %arg1, %c0_i32 : i32
    %1 = arith.extui %0 : i1 to i32
    %c0_i32_0 = arith.constant 0 : i32
    %2 = arith.cmpi ne, %1, %c0_i32_0 : i32
    scf.if %2 {
      %cst_13 = arith.constant 0.000000e+00 : f32
      %19 = vector.broadcast %cst_13 : f32 to vector<1x128xf32>
      %c0_14 = arith.constant 0 : index
      %c0_15 = arith.constant 0 : index
      %20 = vector.load %arg5[%c0_14, %c0_15] : memref<1x128xf32, #tpu.memory_space<vmem>>, vector<1x128xf32>
      tpu.vector_store %arg5[%c0_14, %c0_15], %19 {strides = array<i32>} : memref<1x128xf32, #tpu.memory_space<vmem>>, vector<1x128xf32>,
      %cst_16 = arith.constant 0.000000e+00 : f32
      %21 = vector.broadcast %cst_16 : f32 to vector<1x128xf32>
      %c0_17 = arith.constant 0 : index
      %c0_18 = arith.constant 0 : index
      %22 = vector.load %arg6[%c0_17, %c0_18] : memref<1x128xf32, #tpu.memory_space<vmem>>, vector<1x128xf32>
      tpu.vector_store %arg6[%c0_17, %c0_18], %21 {strides = array<i32>} : memref<1x128xf32, #tpu.memory_space<vmem>>, vector<1x128xf32>,
    } else {
    }
    %c0 = arith.constant 0 : index
    %c0_1 = arith.constant 0 : index
    %c0_2 = arith.constant 0 : index
    %3 = vector.load %arg2[%c0, %c0_1, %c0_2] : memref<1x64x128xf32, #tpu.memory_space<vmem>>, vector<1x64x128xf32>
    %4 = vector.shape_cast %3 : vector<1x64x128xf32> to vector<64x128xf32>
    %c0_3 = arith.constant 0 : index
    %c0_4 = arith.constant 0 : index
    %5 = vector.load %arg5[%c0_3, %c0_4] : memref<1x128xf32, #tpu.memory_space<vmem>>, vector<1x128xf32>
    %cst = arith.constant dense<0.000000e+00> : vector<128xf32>
    %6 = vector.multi_reduction <add>, %4, %cst [0] : vector<64x128xf32> to vector<128xf32>
    %7 = vector.shape_cast %6 : vector<128xf32> to vector<1x128xf32>
    %8 = arith.addf %5, %7 : vector<1x128xf32>
    %c0_5 = arith.constant 0 : index
    %c0_6 = arith.constant 0 : index
    %9 = vector.load %arg5[%c0_5, %c0_6] : memref<1x128xf32, #tpu.memory_space<vmem>>, vector<1x128xf32>
    tpu.vector_store %arg5[%c0_5, %c0_6], %8 {strides = array<i32>} : memref<1x128xf32, #tpu.memory_space<vmem>>, vector<1x128xf32>,
    %c0_7 = arith.constant 0 : index
    %c0_8 = arith.constant 0 : index
    %10 = vector.load %arg6[%c0_7, %c0_8] : memref<1x128xf32, #tpu.memory_space<vmem>>, vector<1x128xf32>
    %11 = arith.mulf %4, %4 : vector<64x128xf32>
    %cst_9 = arith.constant dense<0.000000e+00> : vector<128xf32>
    %12 = vector.multi_reduction <add>, %11, %cst_9 [0] : vector<64x128xf32> to vector<128xf32>
    %13 = vector.shape_cast %12 : vector<128xf32> to vector<1x128xf32>
    %14 = arith.addf %10, %13 : vector<1x128xf32>
    %c0_10 = arith.constant 0 : index
    %c0_11 = arith.constant 0 : index
    %15 = vector.load %arg6[%c0_10, %c0_11] : memref<1x128xf32, #tpu.memory_space<vmem>>, vector<1x128xf32>
    tpu.vector_store %arg6[%c0_10, %c0_11], %14 {strides = array<i32>} : memref<1x128xf32, #tpu.memory_space<vmem>>, vector<1x128xf32>,
    %c2_i32 = arith.constant 2 : i32
    %16 = arith.cmpi eq, %arg1, %c2_i32 : i32
    %17 = arith.extui %16 : i1 to i32
    %c0_i32_12 = arith.constant 0 : i32
    %18 = arith.cmpi ne, %17, %c0_i32_12 : i32
    scf.if %18 {
      %c0_13 = arith.constant 0 : index
      %c0_14 = arith.constant 0 : index
      %19 = vector.load %arg5[%c0_13, %c0_14] : memref<1x128xf32, #tpu.memory_space<vmem>>, vector<1x128xf32>
      %c0_15 = arith.constant 0 : index
      %c0_16 = arith.constant 0 : index
      %c0_17 = arith.constant 0 : index
      %20 = vector.load %arg3[%c0_15, %c0_16, %c0_17] : memref<1x1x128xf32, #tpu.memory_space<vmem>>, vector<1x1x128xf32>
      %21 = vector.shape_cast %20 : vector<1x1x128xf32> to vector<1x128xf32>
      %22 = vector.shape_cast %19 : vector<1x128xf32> to vector<1x1x128xf32>
      tpu.vector_store %arg3[%c0_15, %c0_16, %c0_17], %22 {strides = array<i32>} : memref<1x1x128xf32, #tpu.memory_space<vmem>>, vector<1x1x128xf32>,
      %c0_18 = arith.constant 0 : index
      %c0_19 = arith.constant 0 : index
      %23 = vector.load %arg6[%c0_18, %c0_19] : memref<1x128xf32, #tpu.memory_space<vmem>>, vector<1x128xf32>
      %c0_20 = arith.constant 0 : index
      %c0_21 = arith.constant 0 : index
      %c0_22 = arith.constant 0 : index
      %24 = vector.load %arg4[%c0_20, %c0_21, %c0_22] : memref<1x1x128xf32, #tpu.memory_space<vmem>>, vector<1x1x128xf32>
      %25 = vector.shape_cast %24 : vector<1x1x128xf32> to vector<1x128xf32>
      %26 = vector.shape_cast %23 : vector<1x128xf32> to vector<1x1x128xf32>
      tpu.vector_store %arg4[%c0_20, %c0_21, %c0_22], %26 {strides = array<i32>} : memref<1x1x128xf32, #tpu.memory_space<vmem>>, vector<1x1x128xf32>,
    } else {
    }
    return
  }
  func.func @transform_0(%arg0: i32, %arg1: i32) -> (i32, i32, i32) {
    %c0_i32 = arith.constant 0 : i32
    %c0_i32_0 = arith.constant 0 : i32
    return %arg0, %arg1, %c0_i32 : i32, i32, i32
  }
  func.func @transform_1(%arg0: i32, %arg1: i32) -> (i32, i32, i32) {
    %c0_i32 = arith.constant 0 : i32
    %c0_i32_0 = arith.constant 0 : i32
    %c0_i32_1 = arith.constant 0 : i32
    return %arg0, %c0_i32, %c0_i32_0 : i32, i32, i32
  }
  func.func @transform_2(%arg0: i32, %arg1: i32) -> (i32, i32, i32) {
    %c0_i32 = arith.constant 0 : i32
    %c0_i32_0 = arith.constant 0 : i32
    %c0_i32_1 = arith.constant 0 : i32
    return %arg0, %c0_i32, %c0_i32_0 : i32, i32, i32
  }
}

module attributes {stable_mosaic.version = 11 : i64} {
  func.func @_gn_apply_kernel(%arg0: i32, %arg1: i32, %arg2: memref<1x64x128xf32, #tpu.memory_space<vmem>>, %arg3: memref<1x64x128xf32, #tpu.memory_space<vmem>>, %arg4: memref<1x128xf32, #tpu.memory_space<vmem>>, %arg5: memref<1x128xf32, #tpu.memory_space<vmem>>, %arg6: memref<1x1x1xf32, #tpu.memory_space<vmem>>, %arg7: memref<1x1x1xf32, #tpu.memory_space<vmem>>, %arg8: memref<1x64x128xf32, #tpu.memory_space<vmem>>) attributes {dimension_semantics = [#tpu.dimension_semantics<parallel>, #tpu.dimension_semantics<parallel>], iteration_bounds = array<i64: 2, 3>, scalar_prefetch = 0 : i64, scratch_operands = 0 : i64, tpu.core_type = #tpu.core_type<tc>, window_params = [{transform_indices = @transform_0, window_bounds = array<i64: 1, 64, 128>}, {transform_indices = @transform_1, window_bounds = array<i64: 1, 64, 128>}, {pipeline_mode = #tpu.pipeline_mode<synchronous>, transform_indices = @transform_2, window_bounds = array<i64: 1, 128>}, {pipeline_mode = #tpu.pipeline_mode<synchronous>, transform_indices = @transform_3, window_bounds = array<i64: 1, 128>}, {transform_indices = @transform_4, window_bounds = array<i64: 1, 1, 1>}, {transform_indices = @transform_5, window_bounds = array<i64: 1, 1, 1>}, {transform_indices = @transform_6, window_bounds = array<i64: 1, 64, 128>}]} {
    %c0 = arith.constant 0 : index
    %c0_0 = arith.constant 0 : index
    %c0_1 = arith.constant 0 : index
    %0 = vector.load %arg2[%c0, %c0_0, %c0_1] : memref<1x64x128xf32, #tpu.memory_space<vmem>>, vector<1x64x128xf32>
    %1 = vector.shape_cast %0 : vector<1x64x128xf32> to vector<64x128xf32>
    %c0_2 = arith.constant 0 : index
    %c0_3 = arith.constant 0 : index
    %c0_4 = arith.constant 0 : index
    %2 = vector.load %arg6[%c0_2, %c0_3, %c0_4] : memref<1x1x1xf32, #tpu.memory_space<vmem>>, vector<1x1x1xf32>
    %3 = vector.shape_cast %2 : vector<1x1x1xf32> to vector<1x1xf32>
    %c0_5 = arith.constant 0 : index
    %c0_6 = arith.constant 0 : index
    %c0_7 = arith.constant 0 : index
    %4 = vector.load %arg7[%c0_5, %c0_6, %c0_7] : memref<1x1x1xf32, #tpu.memory_space<vmem>>, vector<1x1x1xf32>
    %5 = vector.shape_cast %4 : vector<1x1x1xf32> to vector<1x1xf32>
    %6 = vector.broadcast %3 : vector<1x1xf32> to vector<64x128xf32>
    %7 = arith.subf %1, %6 : vector<64x128xf32>
    %8 = vector.broadcast %5 : vector<1x1xf32> to vector<64x128xf32>
    %9 = arith.mulf %7, %8 : vector<64x128xf32>
    %c0_8 = arith.constant 0 : index
    %c0_9 = arith.constant 0 : index
    %10 = vector.load %arg4[%c0_8, %c0_9] : memref<1x128xf32, #tpu.memory_space<vmem>>, vector<1x128xf32>
    %11 = vector.broadcast %10 : vector<1x128xf32> to vector<64x128xf32>
    %12 = arith.mulf %9, %11 : vector<64x128xf32>
    %c0_10 = arith.constant 0 : index
    %c0_11 = arith.constant 0 : index
    %13 = vector.load %arg5[%c0_10, %c0_11] : memref<1x128xf32, #tpu.memory_space<vmem>>, vector<1x128xf32>
    %14 = vector.broadcast %13 : vector<1x128xf32> to vector<64x128xf32>
    %15 = arith.addf %12, %14 : vector<64x128xf32>
    %c0_12 = arith.constant 0 : index
    %c0_13 = arith.constant 0 : index
    %c0_14 = arith.constant 0 : index
    %16 = vector.load %arg3[%c0_12, %c0_13, %c0_14] : memref<1x64x128xf32, #tpu.memory_space<vmem>>, vector<1x64x128xf32>
    %17 = vector.shape_cast %16 : vector<1x64x128xf32> to vector<64x128xf32>
    %18 = arith.addf %15, %17 : vector<64x128xf32>
    %c0_15 = arith.constant 0 : index
    %c0_16 = arith.constant 0 : index
    %c0_17 = arith.constant 0 : index
    %19 = vector.load %arg8[%c0_15, %c0_16, %c0_17] : memref<1x64x128xf32, #tpu.memory_space<vmem>>, vector<1x64x128xf32>
    %20 = vector.shape_cast %19 : vector<1x64x128xf32> to vector<64x128xf32>
    %21 = vector.shape_cast %18 : vector<64x128xf32> to vector<1x64x128xf32>
    tpu.vector_store %arg8[%c0_15, %c0_16, %c0_17], %21 {strides = array<i32>} : memref<1x64x128xf32, #tpu.memory_space<vmem>>, vector<1x64x128xf32>,
    return
  }
  func.func @transform_0(%arg0: i32, %arg1: i32) -> (i32, i32, i32) {
    %c0_i32 = arith.constant 0 : i32
    %c0_i32_0 = arith.constant 0 : i32
    return %arg0, %arg1, %c0_i32 : i32, i32, i32
  }
  func.func @transform_1(%arg0: i32, %arg1: i32) -> (i32, i32, i32) {
    %c0_i32 = arith.constant 0 : i32
    %c0_i32_0 = arith.constant 0 : i32
    return %arg0, %arg1, %c0_i32 : i32, i32, i32
  }
  func.func @transform_2(%arg0: i32, %arg1: i32) -> (i32, i32) {
    %c0_i32 = arith.constant 0 : i32
    %c0_i32_0 = arith.constant 0 : i32
    %c0_i32_1 = arith.constant 0 : i32
    return %c0_i32, %c0_i32_0 : i32, i32
  }
  func.func @transform_3(%arg0: i32, %arg1: i32) -> (i32, i32) {
    %c0_i32 = arith.constant 0 : i32
    %c0_i32_0 = arith.constant 0 : i32
    %c0_i32_1 = arith.constant 0 : i32
    return %c0_i32, %c0_i32_0 : i32, i32
  }
  func.func @transform_4(%arg0: i32, %arg1: i32) -> (i32, i32, i32) {
    %c0_i32 = arith.constant 0 : i32
    %c0_i32_0 = arith.constant 0 : i32
    %c0_i32_1 = arith.constant 0 : i32
    return %arg0, %c0_i32, %c0_i32_0 : i32, i32, i32
  }
  func.func @transform_5(%arg0: i32, %arg1: i32) -> (i32, i32, i32) {
    %c0_i32 = arith.constant 0 : i32
    %c0_i32_0 = arith.constant 0 : i32
    %c0_i32_1 = arith.constant 0 : i32
    return %arg0, %c0_i32, %c0_i32_0 : i32, i32, i32
  }
  func.func @transform_6(%arg0: i32, %arg1: i32) -> (i32, i32, i32) {
    %c0_i32 = arith.constant 0 : i32
    %c0_i32_0 = arith.constant 0 : i32
    return %arg0, %arg1, %c0_i32 : i32, i32, i32
  }
}

</mosaic_0001>

<llo_original>
// kernel: _lambda_.5
$region0: #{_lambda_.5}
  #allocation0 [shape = 'u32[]', space=smem, size = 0x4, offset = 0x4, fixed_abs, tag = 'smem constant byte address 0x4 - core index']
  #allocation1 [shape = 'u32[144,128]{1,0:T(1,128)}', space=vmem, size = 0x12000, scoped, tag = 'internal scratch']
  %s0 = inlined_call_operand.vmem [shape: f32[2,192,128], index: 0, kind: input, shape index: {}]
  %s1 = inlined_call_operand.vmem [shape: f32[192,128], index: 1, kind: input, shape index: {}]
  %s2 = inlined_call_operand.vmem [shape: f32[2,192,128], index: 2, kind: output, shape index: {}]
  %s3 = sld [smem:[#allocation0]]
  $region41: #{_lambda_.5} parent=0
    _
  %s5 = ssub.s32 1, %s3
  %s6 = scalar_select 0, %s5, %s3
  loop: start=0, step=1, limit=8
  $region2: #{_lambda_.5} parent=0 // loop_pre_header
    _
  $region3: #{_lambda_.5} parent=0 // loop_header
    %s8 = sphi 0, %s12
    %p9 = scmp.ge.s32.totalorder %s8, 8
    %s15 = sphi 0, %s27
    %s16 = sphi 0, %s23
    %s17 = sphi 0, %s15
    %s18 = sphi 0, %s16
    %s19 = sphi 0, %s17
    %s20 = sphi 0, %s18
    %s32 = sphi 0, %s34
    %s35 = sphi 0, %s32
    %s36 = sphi 0, %s35
    %s52 = sphi 0, %s36
    %s58 = sphi 0, %s60
    %s61 = sphi 0, %s58
    %s62 = sphi 0, %s61
    %s78 = sphi 0, %s62
    %s86 = sphi 0, %s88
    %s89 = sphi 0, %s86
    %s90 = sphi 0, %s89
    %s106 = sphi 0, %s90
  $region4: #{_lambda_.5} parent=0 // loop_header_branch
    %11 = sbr.rel (%p9) target = $region8
  $region5: #{_lambda_.5} parent=0 // loop_body
    %s13 = ssub.s32 %s8, 1
    %s14 = ssub.s32 %s8, 2
    %s21 = sadd.s32 1, %s16
    %p22 = scmp.ge.s32.totalorder %s21, 2
    %s23 = scalar_select %p22, 0, %s21
    %s24 = sadd.s32 1, %s15
    %s25 = scalar_select %p22, %s24, %s15
    %p26 = scmp.ge.s32.totalorder %s25, 3
    %s27 = scalar_select %p26, 0, %s25
    %s28 = ssub.s32 %s16, %s23
    %s29 = ssub.s32 %s15, %s27
    %s30 = sor.u32 %s28, %s29
    %p31 = scmp.eq.s32.totalorder %s30, 0
    %s33 = sadd.s32 %s32, 1
    %s34 = scalar_select %p31, %s32, %s33
    %p37 = pneg %p31
    %p38 = scmp.eq.s32.totalorder %s8, 5
    %p39 = por %p37, %p38
    %p40 = scmp.ne.s32.totalorder %s32, %s35
    %p41 = scmp.eq.s32.totalorder %s8, 0
    %p42 = por %p40, %p41
    %p43 = scmp.ne.s32.totalorder %s32, %s35
    %p44 = scmp.eq.s32.totalorder %s13, 5
    %p45 = por %p43, %p44
    %p46 = scmp.ne.s32.totalorder %s35, %s36
    %p47 = scmp.eq.s32.totalorder %s13, 0
    %p48 = por %p46, %p47
    %p49 = scmp.ne.s32.totalorder %s35, %s36
    %p50 = scmp.eq.s32.totalorder %s14, 5
    %p51 = por %p49, %p50
    %p53 = scmp.ne.s32.totalorder %s36, %s52
    %p54 = scmp.eq.s32.totalorder %s14, 0
    %p55 = por %p53, %p54
    %s56 = ssub.s32 %s15, %s27
    %p57 = scmp.eq.s32.totalorder %s56, 0
    %s59 = sadd.s32 %s58, 1
    %s60 = scalar_select %p57, %s58, %s59
    %p63 = pneg %p57
    %p64 = scmp.eq.s32.totalorder %s8, 5
    %p65 = por %p63, %p64
    %p66 = scmp.ne.s32.totalorder %s58, %s61
    %p67 = scmp.eq.s32.totalorder %s8, 0
    %p68 = por %p66, %p67
    %p69 = scmp.ne.s32.totalorder %s58, %s61
    %p70 = scmp.eq.s32.totalorder %s13, 5
    %p71 = por %p69, %p70
    %p72 = scmp.ne.s32.totalorder %s61, %s62
    %p73 = scmp.eq.s32.totalorder %s13, 0
    %p74 = por %p72, %p73
    %p75 = scmp.ne.s32.totalorder %s61, %s62
    %p76 = scmp.eq.s32.totalorder %s14, 5
    %p77 = por %p75, %p76
    %p79 = scmp.ne.s32.totalorder %s62, %s78
    %p80 = scmp.eq.s32.totalorder %s14, 0
    %p81 = por %p79, %p80
    %s82 = ssub.s32 %s16, %s23
    %s83 = ssub.s32 %s15, %s27
    %s84 = sor.u32 %s82, %s83
    %p85 = scmp.eq.s32.totalorder %s84, 0
    %s87 = sadd.s32 %s86, 1
    %s88 = scalar_select %p85, %s86, %s87
    %p91 = pneg %p85
    %p92 = scmp.eq.s32.totalorder %s8, 5
    %p93 = por %p91, %p92
    %p94 = scmp.ne.s32.totalorder %s86, %s89
    %p95 = scmp.eq.s32.totalorder %s8, 0
    %p96 = por %p94, %p95
    %p97 = scmp.ne.s32.totalorder %s86, %s89
    %p98 = scmp.eq.s32.totalorder %s13, 5
    %p99 = por %p97, %p98
    %p100 = scmp.ne.s32.totalorder %s89, %s90
    %p101 = scmp.eq.s32.totalorder %s13, 0
    %p102 = por %p100, %p101
    %p103 = scmp.ne.s32.totalorder %s89, %s90
    %p104 = scmp.eq.s32.totalorder %s14, 5
    %p105 = por %p103, %p104
    %p107 = scmp.ne.s32.totalorder %s90, %s106
    %p108 = scmp.eq.s32.totalorder %s14, 0
    %p109 = por %p107, %p108
    %p110 = scmp.le.s32.totalorder 1, %s8
    %p111 = scmp.lt.s32.totalorder %s8, 7
    %p112 = pnand %p110, %p111
    %p113 = pneg %p112
    // Predicated region
    $region9: #{_lambda_.5} parent=5 // pred_check
      _
    $region10: #{_lambda_.5} parent=5 // pred_check_branch
      %115 = sbr.rel (%p112) target = $region12
    $region11: #{_lambda_.5} parent=5 // pred_region
      %s116 = ssub.s32 %s8, 1
    $region12: #{_lambda_.5} parent=5 // pred_fallthru
      _
    %p117 = scmp.lt.s32.totalorder %s8, 6
    // Predicated region
    $region13: #{_lambda_.5} parent=5 // pred_check
      %p118 = pneg %p117
    $region14: #{_lambda_.5} parent=5 // pred_check_branch
      %120 = sbr.rel (%p118) target = $region16
    $region15: #{_lambda_.5} parent=5 // pred_region
      // Predicated region
      $region17: #{_lambda_.5} parent=15 // pred_check
        %p121 = pneg %p42
      $region18: #{_lambda_.5} parent=15 // pred_check_branch
        %123 = sbr.rel (%p121) target = $region20
      $region19: #{_lambda_.5} parent=15 // pred_region
        %s124 = smul.u32 8, %s15
        %p125 = scmp.lt.s32.totalorder %s16, 1
        %s126 = scalar_select %p125, %s16, 1
        %p127 = scmp.lt.s32.totalorder %s124, 23
        %s128 = scalar_select %p127, %s124, 23
        %s129 = smul.addr %s126, 24
        %s130 = sadd.s32 %s128, %s129
        %s131 = smul.addr %s130, 8
        %s132 = scalar_lea.vmem %s0, %s131
        %s133 = smul.u32 8, %s15
      $region20: #{_lambda_.5} parent=15 // pred_fallthru
        _
      // Predicated region
      $region21: #{_lambda_.5} parent=15 // pred_check
        %p134 = pneg %p68
      $region22: #{_lambda_.5} parent=15 // pred_check_branch
        %136 = sbr.rel (%p134) target = $region24
      $region23: #{_lambda_.5} parent=15 // pred_region
        %s137 = smul.u32 8, %s15
        %p138 = scmp.lt.s32.totalorder %s137, 23
        %s139 = scalar_select %p138, %s137, 23
        %s140 = smul.addr %s139, 8
        %s141 = scalar_lea.vmem %s1, %s140
        %s142 = smul.u32 8, %s15
      $region24: #{_lambda_.5} parent=15 // pred_fallthru
        _
    $region16: #{_lambda_.5} parent=5 // pred_fallthru
      _
    %p143 = scmp.le.s32.totalorder 1, %s8
    %p144 = scmp.lt.s32.totalorder %s8, 7
    %p145 = pnand %p143, %p144
    %p146 = pneg %p145
    // Predicated region
    $region25: #{_lambda_.5} parent=5 // pred_check
      _
    $region26: #{_lambda_.5} parent=5 // pred_check_branch
      %148 = sbr.rel (%p145) target = $region28
    $region27: #{_lambda_.5} parent=5 // pred_region
      %s149 = ssub.s32 %s8, 1
      %s150 = smul.u32 8, %s17
      %p151 = scmp.lt.s32.totalorder %s18, 1
      %s152 = scalar_select %p151, %s18, 1
      %p153 = scmp.lt.s32.totalorder %s150, 23
      %s154 = scalar_select %p153, %s150, 23
      %s155 = smul.addr %s152, 24
      %s156 = sadd.s32 %s154, %s155
      %s157 = smul.addr %s156, 8
      %s158 = scalar_lea.vmem %s0, %s157
      %p159 = pneg %p48
      %p160 = pneg %p45
      %s161 = smul.u32 8, %s17
      %p162 = scmp.lt.s32.totalorder %s161, 23
      %s163 = scalar_select %p162, %s161, 23
      %s164 = smul.addr %s163, 8
      %s165 = scalar_lea.vmem %s1, %s164
      %p166 = pneg %p74
      %p167 = pneg %p71
      %p168 = pneg %p102
      %p169 = pneg %p99
      %s170 = smul.u32 8, %s17
      %p171 = scmp.lt.s32.totalorder %s18, 1
      %s172 = scalar_select %p171, %s18, 1
      %p173 = scmp.lt.s32.totalorder %s170, 23
      %s174 = scalar_select %p173, %s170, 23
      %s175 = smul.addr %s172, 24
      %s176 = sadd.s32 %s174, %s175
      %s177 = smul.addr %s176, 8
      %s178 = scalar_lea.vmem %s2, %s177
      %s179 = smul.u32 8, %s17
      %p180 = scmp.lt.s32.totalorder %s18, 1
      %s181 = scalar_select %p180, %s18, 1
      %p182 = scmp.lt.s32.totalorder %s179, 23
      %s183 = scalar_select %p182, %s179, 23
      %s184 = smul.addr %s181, 24
      %s185 = sadd.s32 %s183, %s184
      %s186 = smul.addr %s185, 8
      %s187 = scalar_lea.vmem %s0, %s186
      %s188 = smul.u32 8, %s17
      %s189 = smul.u32 8, %s17
      %p190 = scmp.lt.s32.totalorder %s189, 23
      %s191 = scalar_select %p190, %s189, 23
      %s192 = smul.addr %s191, 8
      %s193 = scalar_lea.vmem %s1, %s192
      %s194 = smul.u32 8, %s17
      %s195 = smul.u32 8, %s17
      %p196 = scmp.lt.s32.totalorder %s18, 1
      %s197 = scalar_select %p196, %s18, 1
      %p198 = scmp.lt.s32.totalorder %s195, 23
      %s199 = scalar_select %p198, %s195, 23
      %s200 = smul.addr %s197, 24
      %s201 = sadd.s32 %s199, %s200
      %s202 = smul.addr %s201, 8
      %s203 = scalar_lea.vmem %s2, %s202
      %s204 = smul.u32 8, %s17
      %v205 = vld [vmem:[%s187] sm:$0xff]
      %v206 = vld [vmem:[%s187 + $0x8] sm:$0xff]
      %v207 = vld [vmem:[%s187 + $0x10] sm:$0xff]
      %v208 = vld [vmem:[%s187 + $0x18] sm:$0xff]
      %v209 = vld [vmem:[%s187 + $0x20] sm:$0xff]
      %v210 = vld [vmem:[%s187 + $0x28] sm:$0xff]
      %v211 = vld [vmem:[%s187 + $0x30] sm:$0xff]
      %v212 = vld [vmem:[%s187 + $0x38] sm:$0xff]
      %v213 = vld [vmem:[%s193] sm:$0xff]
      %v214 = vld [vmem:[%s193 + $0x8] sm:$0xff]
      %v215 = vld [vmem:[%s193 + $0x10] sm:$0xff]
      %v216 = vld [vmem:[%s193 + $0x18] sm:$0xff]
      %v217 = vld [vmem:[%s193 + $0x20] sm:$0xff]
      %v218 = vld [vmem:[%s193 + $0x28] sm:$0xff]
      %v219 = vld [vmem:[%s193 + $0x30] sm:$0xff]
      %v220 = vld [vmem:[%s193 + $0x38] sm:$0xff]
      %v221 = vadd.f32 %v205, %v213
      %v222 = vadd.f32 %v206, %v214
      %v223 = vadd.f32 %v207, %v215
      %v224 = vadd.f32 %v208, %v216
      %v225 = vadd.f32 %v209, %v217
      %v226 = vadd.f32 %v210, %v218
      %v227 = vadd.f32 %v211, %v219
      %v228 = vadd.f32 %v212, %v220
      %229 = vst [vmem:[%s203] sm:$0xff] %v221
      %230 = vst [vmem:[%s203 + $0x8] sm:$0xff] %v222
      %231 = vst [vmem:[%s203 + $0x10] sm:$0xff] %v223
      %232 = vst [vmem:[%s203 + $0x18] sm:$0xff] %v224
      %233 = vst [vmem:[%s203 + $0x20] sm:$0xff] %v225
      %234 = vst [vmem:[%s203 + $0x28] sm:$0xff] %v226
      %235 = vst [vmem:[%s203 + $0x30] sm:$0xff] %v227
      %236 = vst [vmem:[%s203 + $0x38] sm:$0xff] %v228
      %s237 = smul.u32 8, %s17
      %p238 = scmp.lt.s32.totalorder %s18, 1
      %s239 = scalar_select %p238, %s18, 1
      %p240 = scmp.lt.s32.totalorder %s237, 23
      %s241 = scalar_select %p240, %s237, 23
      %s242 = smul.addr %s239, 24
      %s243 = sadd.s32 %s241, %s242
      %s244 = smul.addr %s243, 8
      %s245 = scalar_lea.vmem %s2, %s244
      // Predicated region
      $region29: #{_lambda_.5} parent=27 // pred_check
        %p246 = pneg %p99
      $region30: #{_lambda_.5} parent=27 // pred_check_branch
        %248 = sbr.rel (%p246) target = $region32
      $region31: #{_lambda_.5} parent=27 // pred_region
        %s249 = smul.u32 8, %s17
      $region32: #{_lambda_.5} parent=27 // pred_fallthru
        _
    $region28: #{_lambda_.5} parent=5 // pred_fallthru
      _
    %p250 = scmp.le.s32.totalorder 2, %s8
    // Predicated region
    $region33: #{_lambda_.5} parent=5 // pred_check
      %p251 = pneg %p250
    $region34: #{_lambda_.5} parent=5 // pred_check_branch
      %253 = sbr.rel (%p251) target = $region36
    $region35: #{_lambda_.5} parent=5 // pred_region
      %s254 = ssub.s32 %s8, 2
      // Predicated region
      $region37: #{_lambda_.5} parent=35 // pred_check
        %p255 = pneg %p105
      $region38: #{_lambda_.5} parent=35 // pred_check_branch
        %257 = sbr.rel (%p255) target = $region40
      $region39: #{_lambda_.5} parent=35 // pred_region
        %s258 = smul.u32 8, %s19
        %p259 = scmp.lt.s32.totalorder %s20, 1
        %s260 = scalar_select %p259, %s20, 1
        %p261 = scmp.lt.s32.totalorder %s258, 23
        %s262 = scalar_select %p261, %s258, 23
        %s263 = smul.addr %s260, 24
        %s264 = sadd.s32 %s262, %s263
        %s265 = smul.addr %s264, 8
        %s266 = scalar_lea.vmem %s2, %s265
      $region40: #{_lambda_.5} parent=35 // pred_fallthru
        _
    $region36: #{_lambda_.5} parent=5 // pred_fallthru
      _
  $region6: #{_lambda_.5} parent=0 // loop_footer
    %s12 = sadd.s32 1, %s8
  $region7: #{_lambda_.5} parent=0 // loop_footer_branch
    %7 = sbr.rel target = $region3
  $region8: #{_lambda_.5} parent=0 // loop_exit
    _

// kernel: _lambda_.6
$region0: #{_lambda_.6}
  #allocation0 [shape = 'u32[]', space=smem, size = 0x4, offset = 0x4, fixed_abs, tag = 'smem constant byte address 0x4 - core index']
  #allocation1 [shape = 'u32[144,128]{1,0:T(1,128)}', space=vmem, size = 0x12000, scoped, tag = 'internal scratch']
  #allocation2 [shape = 'f32[1,128]{1,0:T(1,128)}', space=vmem, size = 0x200, scoped, tag = 'scratch operand']
  #allocation3 [shape = 'f32[1,128]{1,0:T(1,128)}', space=vmem, size = 0x200, scoped, tag = 'scratch operand']
  %s0 = inlined_call_operand.vmem [shape: f32[2,192,128], index: 0, kind: input, shape index: {}]
  %s1 = inlined_call_operand.vmem [shape: f32[2,1,128], index: 1, kind: output, shape index: {0}]
  %s2 = inlined_call_operand.vmem [shape: f32[2,1,128], index: 2, kind: output, shape index: {1}]
  %3 = xla_tuple %s1, %s2
  %s4 = sld [smem:[#allocation0]]
  $region53: #{_lambda_.6} parent=0
    _
  %s6 = ssub.s32 1, %s4
  %s7 = scalar_select 0, %s6, %s4
  loop: start=0, step=1, limit=8
  $region2: #{_lambda_.6} parent=0 // loop_pre_header
    _
  $region3: #{_lambda_.6} parent=0 // loop_header
    %s9 = sphi 0, %s13
    %p10 = scmp.ge.s32.totalorder %s9, 8
    %s16 = sphi 0, %s28
    %s17 = sphi 0, %s24
    %s18 = sphi 0, %s16
    %s19 = sphi 0, %s17
    %s20 = sphi 0, %s18
    %s21 = sphi 0, %s19
    %s33 = sphi 0, %s35
    %s36 = sphi 0, %s33
    %s37 = sphi 0, %s36
    %s53 = sphi 0, %s37
    %s59 = sphi 0, %s61
    %s62 = sphi 0, %s59
    %s63 = sphi 0, %s62
    %s79 = sphi 0, %s63
    %s85 = sphi 0, %s87
    %s88 = sphi 0, %s85
    %s89 = sphi 0, %s88
    %s105 = sphi 0, %s89
  $region4: #{_lambda_.6} parent=0 // loop_header_branch
    %12 = sbr.rel (%p10) target = $region8
  $region5: #{_lambda_.6} parent=0 // loop_body
    %s14 = ssub.s32 %s9, 1
    %s15 = ssub.s32 %s9, 2
    %s22 = sadd.s32 1, %s17
    %p23 = scmp.ge.s32.totalorder %s22, 3
    %s24 = scalar_select %p23, 0, %s22
    %s25 = sadd.s32 1, %s16
    %s26 = scalar_select %p23, %s25, %s16
    %p27 = scmp.ge.s32.totalorder %s26, 2
    %s28 = scalar_select %p27, 0, %s26
    %s29 = ssub.s32 %s16, %s28
    %s30 = ssub.s32 %s17, %s24
    %s31 = sor.u32 %s29, %s30
    %p32 = scmp.eq.s32.totalorder %s31, 0
    %s34 = sadd.s32 %s33, 1
    %s35 = scalar_select %p32, %s33, %s34
    %p38 = pneg %p32
    %p39 = scmp.eq.s32.totalorder %s9, 5
    %p40 = por %p38, %p39
    %p41 = scmp.ne.s32.totalorder %s33, %s36
    %p42 = scmp.eq.s32.totalorder %s9, 0
    %p43 = por %p41, %p42
    %p44 = scmp.ne.s32.totalorder %s33, %s36
    %p45 = scmp.eq.s32.totalorder %s14, 5
    %p46 = por %p44, %p45
    %p47 = scmp.ne.s32.totalorder %s36, %s37
    %p48 = scmp.eq.s32.totalorder %s14, 0
    %p49 = por %p47, %p48
    %p50 = scmp.ne.s32.totalorder %s36, %s37
    %p51 = scmp.eq.s32.totalorder %s15, 5
    %p52 = por %p50, %p51
    %p54 = scmp.ne.s32.totalorder %s37, %s53
    %p55 = scmp.eq.s32.totalorder %s15, 0
    %p56 = por %p54, %p55
    %s57 = ssub.s32 %s16, %s28
    %p58 = scmp.eq.s32.totalorder %s57, 0
    %s60 = sadd.s32 %s59, 1
    %s61 = scalar_select %p58, %s59, %s60
    %p64 = pneg %p58
    %p65 = scmp.eq.s32.totalorder %s9, 5
    %p66 = por %p64, %p65
    %p67 = scmp.ne.s32.totalorder %s59, %s62
    %p68 = scmp.eq.s32.totalorder %s9, 0
    %p69 = por %p67, %p68
    %p70 = scmp.ne.s32.totalorder %s59, %s62
    %p71 = scmp.eq.s32.totalorder %s14, 5
    %p72 = por %p70, %p71
    %p73 = scmp.ne.s32.totalorder %s62, %s63
    %p74 = scmp.eq.s32.totalorder %s14, 0
    %p75 = por %p73, %p74
    %p76 = scmp.ne.s32.totalorder %s62, %s63
    %p77 = scmp.eq.s32.totalorder %s15, 5
    %p78 = por %p76, %p77
    %p80 = scmp.ne.s32.totalorder %s63, %s79
    %p81 = scmp.eq.s32.totalorder %s15, 0
    %p82 = por %p80, %p81
    %s83 = ssub.s32 %s16, %s28
    %p84 = scmp.eq.s32.totalorder %s83, 0
    %s86 = sadd.s32 %s85, 1
    %s87 = scalar_select %p84, %s85, %s86
    %p90 = pneg %p84
    %p91 = scmp.eq.s32.totalorder %s9, 5
    %p92 = por %p90, %p91
    %p93 = scmp.ne.s32.totalorder %s85, %s88
    %p94 = scmp.eq.s32.totalorder %s9, 0
    %p95 = por %p93, %p94
    %p96 = scmp.ne.s32.totalorder %s85, %s88
    %p97 = scmp.eq.s32.totalorder %s14, 5
    %p98 = por %p96, %p97
    %p99 = scmp.ne.s32.totalorder %s88, %s89
    %p100 = scmp.eq.s32.totalorder %s14, 0
    %p101 = por %p99, %p100
    %p102 = scmp.ne.s32.totalorder %s88, %s89
    %p103 = scmp.eq.s32.totalorder %s15, 5
    %p104 = por %p102, %p103
    %p106 = scmp.ne.s32.totalorder %s89, %s105
    %p107 = scmp.eq.s32.totalorder %s15, 0
    %p108 = por %p106, %p107
    %p109 = scmp.le.s32.totalorder 1, %s9
    %p110 = scmp.lt.s32.totalorder %s9, 7
    %p111 = pnand %p109, %p110
    %p112 = pneg %p111
    // Predicated region
    $region9: #{_lambda_.6} parent=5 // pred_check
      _
    $region10: #{_lambda_.6} parent=5 // pred_check_branch
      %114 = sbr.rel (%p111) target = $region12
    $region11: #{_lambda_.6} parent=5 // pred_region
      %s115 = ssub.s32 %s9, 1
    $region12: #{_lambda_.6} parent=5 // pred_fallthru
      _
    %p116 = scmp.lt.s32.totalorder %s9, 6
    // Predicated region
    $region13: #{_lambda_.6} parent=5 // pred_check
      %p117 = pneg %p116
    $region14: #{_lambda_.6} parent=5 // pred_check_branch
      %119 = sbr.rel (%p117) target = $region16
    $region15: #{_lambda_.6} parent=5 // pred_region
      // Predicated region
      $region17: #{_lambda_.6} parent=15 // pred_check
        %p120 = pneg %p43
      $region18: #{_lambda_.6} parent=15 // pred_check_branch
        %122 = sbr.rel (%p120) target = $region20
      $region19: #{_lambda_.6} parent=15 // pred_region
        %s123 = smul.u32 8, %s17
        %p124 = scmp.lt.s32.totalorder %s16, 1
        %s125 = scalar_select %p124, %s16, 1
        %p126 = scmp.lt.s32.totalorder %s123, 23
        %s127 = scalar_select %p126, %s123, 23
        %s128 = smul.addr %s125, 24
        %s129 = sadd.s32 %s127, %s128
        %s130 = smul.addr %s129, 8
        %s131 = scalar_lea.vmem %s0, %s130
        %s132 = smul.u32 8, %s17
      $region20: #{_lambda_.6} parent=15 // pred_fallthru
        _
    $region16: #{_lambda_.6} parent=5 // pred_fallthru
      _
    %p133 = scmp.le.s32.totalorder 1, %s9
    %p134 = scmp.lt.s32.totalorder %s9, 7
    %p135 = pnand %p133, %p134
    %p136 = pneg %p135
    // Predicated region
    $region21: #{_lambda_.6} parent=5 // pred_check
      _
    $region22: #{_lambda_.6} parent=5 // pred_check_branch
      %138 = sbr.rel (%p135) target = $region24
    $region23: #{_lambda_.6} parent=5 // pred_region
      %s139 = ssub.s32 %s9, 1
      %s140 = smul.u32 8, %s19
      %p141 = scmp.lt.s32.totalorder %s18, 1
      %s142 = scalar_select %p141, %s18, 1
      %p143 = scmp.lt.s32.totalorder %s140, 23
      %s144 = scalar_select %p143, %s140, 23
      %s145 = smul.addr %s142, 24
      %s146 = sadd.s32 %s144, %s145
      %s147 = smul.addr %s146, 8
      %s148 = scalar_lea.vmem %s0, %s147
      %p149 = pneg %p49
      %p150 = pneg %p46
      %p151 = pneg %p75
      %p152 = pneg %p72
      %p153 = scmp.lt.s32.totalorder %s18, 1
      %s154 = scalar_select %p153, %s18, 1
      %s155 = scalar_lea.vmem %s1, %s154
      %p156 = pneg %p101
      %p157 = pneg %p98
      %p158 = scmp.lt.s32.totalorder %s18, 1
      %s159 = scalar_select %p158, %s18, 1
      %s160 = scalar_lea.vmem %s2, %s159
      %s161 = smul.u32 8, %s19
      %p162 = scmp.lt.s32.totalorder %s18, 1
      %s163 = scalar_select %p162, %s18, 1
      %p164 = scmp.lt.s32.totalorder %s161, 23
      %s165 = scalar_select %p164, %s161, 23
      %s166 = smul.addr %s163, 24
      %s167 = sadd.s32 %s165, %s166
      %s168 = smul.addr %s167, 8
      %s169 = scalar_lea.vmem %s0, %s168
      %s170 = smul.u32 8, %s19
      %p171 = scmp.lt.s32.totalorder %s18, 1
      %s172 = scalar_select %p171, %s18, 1
      %s173 = scalar_lea.vmem %s1, %s172
      %p174 = scmp.lt.s32.totalorder %s18, 1
      %s175 = scalar_select %p174, %s18, 1
      %s176 = scalar_lea.vmem %s2, %s175
      %p177 = scmp.eq.s32.totalorder %s19, 0
      // Predicated region
      $region25: #{_lambda_.6} parent=23 // pred_check
        %p178 = pneg %p177
      $region26: #{_lambda_.6} parent=23 // pred_check_branch
        %180 = sbr.rel (%p178) target = $region28
      $region27: #{_lambda_.6} parent=23 // pred_region
        %181 = vst [vmem:[#allocation2] sm:$0x1] 0.0
        %182 = vst [vmem:[#allocation3] sm:$0x1] 0.0
      $region28: #{_lambda_.6} parent=23 // pred_fallthru
        _
      %v183 = vld [vmem:[%s169] sm:$0xff]
      %v184 = vld [vmem:[%s169 + $0x8] sm:$0xff]
      %v185 = vld [vmem:[%s169 + $0x10] sm:$0xff]
      %v186 = vld [vmem:[%s169 + $0x18] sm:$0xff]
      %v187 = vld [vmem:[%s169 + $0x20] sm:$0xff]
      %v188 = vld [vmem:[%s169 + $0x28] sm:$0xff]
      %v189 = vld [vmem:[%s169 + $0x30] sm:$0xff]
      %v190 = vld [vmem:[%s169 + $0x38] sm:$0xff]
      %v191 = vld [vmem:[#allocation2] sm:$0x1]
      %v192 = vadd.f32 %v183, %v184
      %v193 = vadd.f32 %v192, %v185
      %v194 = vadd.f32 %v193, %v186
      %v195 = vadd.f32 %v194, %v187
      %v196 = vadd.f32 %v195, %v188
      %v197 = vadd.f32 %v196, %v189
      %v198 = vadd.f32 %v197, %v190
      %v199 = vrot.slane %v198, 4
      %v200 = vadd.f32 %v198, %v199
      %v201 = vrot.slane %v200, 2
      %v202 = vadd.f32 %v200, %v201
      %v203 = vrot.slane %v202, 1
      %v204 = vadd.f32 %v202, %v203
      %v205 = vadd.f32 %v191, %v204
      %206 = vst [vmem:[#allocation2] sm:$0x1] %v205
      %v207 = vld [vmem:[#allocation3] sm:$0x1]
      %v208 = vmul.f32 %v183, %v183
      %v209 = vmul.f32 %v184, %v184
      %v210 = vmul.f32 %v185, %v185
      %v211 = vmul.f32 %v186, %v186
      %v212 = vmul.f32 %v187, %v187
      %v213 = vmul.f32 %v188, %v188
      %v214 = vmul.f32 %v189, %v189
      %v215 = vmul.f32 %v190, %v190
      %v216 = vadd.f32 %v208, %v209
      %v217 = vadd.f32 %v216, %v210
      %v218 = vadd.f32 %v217, %v211
      %v219 = vadd.f32 %v218, %v212
      %v220 = vadd.f32 %v219, %v213
      %v221 = vadd.f32 %v220, %v214
      %v222 = vadd.f32 %v221, %v215
      %v223 = vrot.slane %v222, 4
      %v224 = vadd.f32 %v222, %v223
      %v225 = vrot.slane %v224, 2
      %v226 = vadd.f32 %v224, %v225
      %v227 = vrot.slane %v226, 1
      %v228 = vadd.f32 %v226, %v227
      %v229 = vadd.f32 %v207, %v228
      %230 = vst [vmem:[#allocation3] sm:$0x1] %v229
      %p231 = scmp.eq.s32.totalorder %s19, 2
      // Predicated region
      $region29: #{_lambda_.6} parent=23 // pred_check
        %p232 = pneg %p231
      $region30: #{_lambda_.6} parent=23 // pred_check_branch
        %234 = sbr.rel (%p232) target = $region32
      $region31: #{_lambda_.6} parent=23 // pred_region
        %v235 = vld [vmem:[#allocation2] sm:$0x1]
        %236 = vst [vmem:[%s173] sm:$0x1] %v235
        %v237 = vld [vmem:[#allocation3] sm:$0x1]
        %238 = vst [vmem:[%s176] sm:$0x1] %v237
      $region32: #{_lambda_.6} parent=23 // pred_fallthru
        _
      %p239 = scmp.lt.s32.totalorder %s18, 1
      %s240 = scalar_select %p239, %s18, 1
      %s241 = scalar_lea.vmem %s1, %s240
      %p242 = scmp.lt.s32.totalorder %s18, 1
      %s243 = scalar_select %p242, %s18, 1
      %s244 = scalar_lea.vmem %s2, %s243
      // Predicated region
      $region33: #{_lambda_.6} parent=23 // pred_check
        %p245 = pneg %p72
      $region34: #{_lambda_.6} parent=23 // pred_check_branch
        %247 = sbr.rel (%p245) target = $region36
      $region35: #{_lambda_.6} parent=23 // pred_region
        _
      $region36: #{_lambda_.6} parent=23 // pred_fallthru
        _
      // Predicated region
      $region37: #{_lambda_.6} parent=23 // pred_check
        %p248 = pneg %p98
      $region38: #{_lambda_.6} parent=23 // pred_check_branch
        %250 = sbr.rel (%p248) target = $region40
      $region39: #{_lambda_.6} parent=23 // pred_region
        _
      $region40: #{_lambda_.6} parent=23 // pred_fallthru
        _
    $region24: #{_lambda_.6} parent=5 // pred_fallthru
      _
    %p251 = scmp.le.s32.totalorder 2, %s9
    // Predicated region
    $region41: #{_lambda_.6} parent=5 // pred_check
      %p252 = pneg %p251
    $region42: #{_lambda_.6} parent=5 // pred_check_branch
      %254 = sbr.rel (%p252) target = $region44
    $region43: #{_lambda_.6} parent=5 // pred_region
      %s255 = ssub.s32 %s9, 2
      // Predicated region
      $region45: #{_lambda_.6} parent=43 // pred_check
        %p256 = pneg %p78
      $region46: #{_lambda_.6} parent=43 // pred_check_branch
        %258 = sbr.rel (%p256) target = $region48
      $region47: #{_lambda_.6} parent=43 // pred_region
        %p259 = scmp.lt.s32.totalorder %s20, 1
        %s260 = scalar_select %p259, %s20, 1
        %s261 = scalar_lea.vmem %s1, %s260
      $region48: #{_lambda_.6} parent=43 // pred_fallthru
        _
      // Predicated region
      $region49: #{_lambda_.6} parent=43 // pred_check
        %p262 = pneg %p104
      $region50: #{_lambda_.6} parent=43 // pred_check_branch
        %264 = sbr.rel (%p262) target = $region52
      $region51: #{_lambda_.6} parent=43 // pred_region
        %p265 = scmp.lt.s32.totalorder %s20, 1
        %s266 = scalar_select %p265, %s20, 1
        %s267 = scalar_lea.vmem %s2, %s266
      $region52: #{_lambda_.6} parent=43 // pred_fallthru
        _
    $region44: #{_lambda_.6} parent=5 // pred_fallthru
      _
  $region6: #{_lambda_.6} parent=0 // loop_footer
    %s13 = sadd.s32 1, %s9
  $region7: #{_lambda_.6} parent=0 // loop_footer_branch
    %8 = sbr.rel target = $region3
  $region8: #{_lambda_.6} parent=0 // loop_exit
    _

// kernel: _lambda_.7
$region0: #{_lambda_.7}
  #allocation0 [shape = 'u32[]', space=smem, size = 0x4, offset = 0x4, fixed_abs, tag = 'smem constant byte address 0x4 - core index']
  #allocation1 [shape = 'u32[144,128]{1,0:T(1,128)}', space=vmem, size = 0x12000, scoped, tag = 'internal scratch']
  %s0 = inlined_call_operand.vmem [shape: f32[2,192,128], index: 0, kind: input, shape index: {}]
  %s1 = inlined_call_operand.vmem [shape: f32[2,192,128], index: 1, kind: input, shape index: {}]
  %s2 = inlined_call_operand.vmem [shape: f32[1,128], index: 2, kind: input, shape index: {}]
  %s3 = inlined_call_operand.vmem [shape: f32[1,128], index: 3, kind: input, shape index: {}]
  %s4 = inlined_call_operand.vmem [shape: f32[2,1,1], index: 4, kind: input, shape index: {}]
  %s5 = inlined_call_operand.vmem [shape: f32[2,1,1], index: 5, kind: input, shape index: {}]
  %s6 = inlined_call_operand.vmem [shape: f32[2,192,128], index: 6, kind: output, shape index: {}]
  %s7 = sld [smem:[#allocation0]]
  $region57: #{_lambda_.7} parent=0
    _
  %s9 = ssub.s32 1, %s7
  %s10 = scalar_select 0, %s9, %s7
  loop: start=0, step=1, limit=8
  $region2: #{_lambda_.7} parent=0 // loop_pre_header
    _
  $region3: #{_lambda_.7} parent=0 // loop_header
    %s12 = sphi 0, %s16
    %p13 = scmp.ge.s32.totalorder %s12, 8
    %s19 = sphi 0, %s31
    %s20 = sphi 0, %s27
    %s21 = sphi 0, %s19
    %s22 = sphi 0, %s20
    %s23 = sphi 0, %s21
    %s24 = sphi 0, %s22
    %s36 = sphi 0, %s38
    %s39 = sphi 0, %s36
    %s40 = sphi 0, %s39
    %s56 = sphi 0, %s40
    %s64 = sphi 0, %s66
    %s67 = sphi 0, %s64
    %s68 = sphi 0, %s67
    %s84 = sphi 0, %s68
    %s88 = sphi 0, %s88
    %s90 = sphi 0, %s88
    %s91 = sphi 0, %s90
    %s105 = sphi 0, %s91
    %s109 = sphi 0, %s109
    %s111 = sphi 0, %s109
    %s112 = sphi 0, %s111
    %s126 = sphi 0, %s112
    %s132 = sphi 0, %s134
    %s135 = sphi 0, %s132
    %s136 = sphi 0, %s135
    %s152 = sphi 0, %s136
    %s158 = sphi 0, %s160
    %s161 = sphi 0, %s158
    %s162 = sphi 0, %s161
    %s178 = sphi 0, %s162
    %s186 = sphi 0, %s188
    %s189 = sphi 0, %s186
    %s190 = sphi 0, %s189
    %s206 = sphi 0, %s190
  $region4: #{_lambda_.7} parent=0 // loop_header_branch
    %15 = sbr.rel (%p13) target = $region8
  $region5: #{_lambda_.7} parent=0 // loop_body
    %s17 = ssub.s32 %s12, 1
    %s18 = ssub.s32 %s12, 2
    %s25 = sadd.s32 1, %s20
    %p26 = scmp.ge.s32.totalorder %s25, 3
    %s27 = scalar_select %p26, 0, %s25
    %s28 = sadd.s32 1, %s19
    %s29 = scalar_select %p26, %s28, %s19
    %p30 = scmp.ge.s32.totalorder %s29, 2
    %s31 = scalar_select %p30, 0, %s29
    %s32 = ssub.s32 %s19, %s31
    %s33 = ssub.s32 %s20, %s27
    %s34 = sor.u32 %s32, %s33
    %p35 = scmp.eq.s32.totalorder %s34, 0
    %s37 = sadd.s32 %s36, 1
    %s38 = scalar_select %p35, %s36, %s37
    %p41 = pneg %p35
    %p42 = scmp.eq.s32.totalorder %s12, 5
    %p43 = por %p41, %p42
    %p44 = scmp.ne.s32.totalorder %s36, %s39
    %p45 = scmp.eq.s32.totalorder %s12, 0
    %p46 = por %p44, %p45
    %p47 = scmp.ne.s32.totalorder %s36, %s39
    %p48 = scmp.eq.s32.totalorder %s17, 5
    %p49 = por %p47, %p48
    %p50 = scmp.ne.s32.totalorder %s39, %s40
    %p51 = scmp.eq.s32.totalorder %s17, 0
    %p52 = por %p50, %p51
    %p53 = scmp.ne.s32.totalorder %s39, %s40
    %p54 = scmp.eq.s32.totalorder %s18, 5
    %p55 = por %p53, %p54
    %p57 = scmp.ne.s32.totalorder %s40, %s56
    %p58 = scmp.eq.s32.totalorder %s18, 0
    %p59 = por %p57, %p58
    %s60 = ssub.s32 %s19, %s31
    %s61 = ssub.s32 %s20, %s27
    %s62 = sor.u32 %s60, %s61
    %p63 = scmp.eq.s32.totalorder %s62, 0
    %s65 = sadd.s32 %s64, 1
    %s66 = scalar_select %p63, %s64, %s65
    %p69 = pneg %p63
    %p70 = scmp.eq.s32.totalorder %s12, 5
    %p71 = por %p69, %p70
    %p72 = scmp.ne.s32.totalorder %s64, %s67
    %p73 = scmp.eq.s32.totalorder %s12, 0
    %p74 = por %p72, %p73
    %p75 = scmp.ne.s32.totalorder %s64, %s67
    %p76 = scmp.eq.s32.totalorder %s17, 5
    %p77 = por %p75, %p76
    %p78 = scmp.ne.s32.totalorder %s67, %s68
    %p79 = scmp.eq.s32.totalorder %s17, 0
    %p80 = por %p78, %p79
    %p81 = scmp.ne.s32.totalorder %s67, %s68
    %p82 = scmp.eq.s32.totalorder %s18, 5
    %p83 = por %p81, %p82
    %p85 = scmp.ne.s32.totalorder %s68, %s84
    %p86 = scmp.eq.s32.totalorder %s18, 0
    %p87 = por %p85, %p86
    %s89 = sadd.s32 %s88, 1
    %p92 = scmp.eq.s32.totalorder %s12, 5
    %p93 = scmp.ne.s32.totalorder %s88, %s90
    %p94 = scmp.eq.s32.totalorder %s12, 0
    %p95 = por %p93, %p94
    %p96 = scmp.ne.s32.totalorder %s88, %s90
    %p97 = scmp.eq.s32.totalorder %s17, 5
    %p98 = por %p96, %p97
    %p99 = scmp.ne.s32.totalorder %s90, %s91
    %p100 = scmp.eq.s32.totalorder %s17, 0
    %p101 = por %p99, %p100
    %p102 = scmp.ne.s32.totalorder %s90, %s91
    %p103 = scmp.eq.s32.totalorder %s18, 5
    %p104 = por %p102, %p103
    %p106 = scmp.ne.s32.totalorder %s91, %s105
    %p107 = scmp.eq.s32.totalorder %s18, 0
    %p108 = por %p106, %p107
    %s110 = sadd.s32 %s109, 1
    %p113 = scmp.eq.s32.totalorder %s12, 5
    %p114 = scmp.ne.s32.totalorder %s109, %s111
    %p115 = scmp.eq.s32.totalorder %s12, 0
    %p116 = por %p114, %p115
    %p117 = scmp.ne.s32.totalorder %s109, %s111
    %p118 = scmp.eq.s32.totalorder %s17, 5
    %p119 = por %p117, %p118
    %p120 = scmp.ne.s32.totalorder %s111, %s112
    %p121 = scmp.eq.s32.totalorder %s17, 0
    %p122 = por %p120, %p121
    %p123 = scmp.ne.s32.totalorder %s111, %s112
    %p124 = scmp.eq.s32.totalorder %s18, 5
    %p125 = por %p123, %p124
    %p127 = scmp.ne.s32.totalorder %s112, %s126
    %p128 = scmp.eq.s32.totalorder %s18, 0
    %p129 = por %p127, %p128
    %s130 = ssub.s32 %s19, %s31
    %p131 = scmp.eq.s32.totalorder %s130, 0
    %s133 = sadd.s32 %s132, 1
    %s134 = scalar_select %p131, %s132, %s133
    %p137 = pneg %p131
    %p138 = scmp.eq.s32.totalorder %s12, 5
    %p139 = por %p137, %p138
    %p140 = scmp.ne.s32.totalorder %s132, %s135
    %p141 = scmp.eq.s32.totalorder %s12, 0
    %p142 = por %p140, %p141
    %p143 = scmp.ne.s32.totalorder %s132, %s135
    %p144 = scmp.eq.s32.totalorder %s17, 5
    %p145 = por %p143, %p144
    %p146 = scmp.ne.s32.totalorder %s135, %s136
    %p147 = scmp.eq.s32.totalorder %s17, 0
    %p148 = por %p146, %p147
    %p149 = scmp.ne.s32.totalorder %s135, %s136
    %p150 = scmp.eq.s32.totalorder %s18, 5
    %p151 = por %p149, %p150
    %p153 = scmp.ne.s32.totalorder %s136, %s152
    %p154 = scmp.eq.s32.totalorder %s18, 0
    %p155 = por %p153, %p154
    %s156 = ssub.s32 %s19, %s31
    %p157 = scmp.eq.s32.totalorder %s156, 0
    %s159 = sadd.s32 %s158, 1
    %s160 = scalar_select %p157, %s158, %s159
    %p163 = pneg %p157
    %p164 = scmp.eq.s32.totalorder %s12, 5
    %p165 = por %p163, %p164
    %p166 = scmp.ne.s32.totalorder %s158, %s161
    %p167 = scmp.eq.s32.totalorder %s12, 0
    %p168 = por %p166, %p167
    %p169 = scmp.ne.s32.totalorder %s158, %s161
    %p170 = scmp.eq.s32.totalorder %s17, 5
    %p171 = por %p169, %p170
    %p172 = scmp.ne.s32.totalorder %s161, %s162
    %p173 = scmp.eq.s32.totalorder %s17, 0
    %p174 = por %p172, %p173
    %p175 = scmp.ne.s32.totalorder %s161, %s162
    %p176 = scmp.eq.s32.totalorder %s18, 5
    %p177 = por %p175, %p176
    %p179 = scmp.ne.s32.totalorder %s162, %s178
    %p180 = scmp.eq.s32.totalorder %s18, 0
    %p181 = por %p179, %p180
    %s182 = ssub.s32 %s19, %s31
    %s183 = ssub.s32 %s20, %s27
    %s184 = sor.u32 %s182, %s183
    %p185 = scmp.eq.s32.totalorder %s184, 0
    %s187 = sadd.s32 %s186, 1
    %s188 = scalar_select %p185, %s186, %s187
    %p191 = pneg %p185
    %p192 = scmp.eq.s32.totalorder %s12, 5
    %p193 = por %p191, %p192
    %p194 = scmp.ne.s32.totalorder %s186, %s189
    %p195 = scmp.eq.s32.totalorder %s12, 0
    %p196 = por %p194, %p195
    %p197 = scmp.ne.s32.totalorder %s186, %s189
    %p198 = scmp.eq.s32.totalorder %s17, 5
    %p199 = por %p197, %p198
    %p200 = scmp.ne.s32.totalorder %s189, %s190
    %p201 = scmp.eq.s32.totalorder %s17, 0
    %p202 = por %p200, %p201
    %p203 = scmp.ne.s32.totalorder %s189, %s190
    %p204 = scmp.eq.s32.totalorder %s18, 5
    %p205 = por %p203, %p204
    %p207 = scmp.ne.s32.totalorder %s190, %s206
    %p208 = scmp.eq.s32.totalorder %s18, 0
    %p209 = por %p207, %p208
    %p210 = scmp.le.s32.totalorder 1, %s12
    %p211 = scmp.lt.s32.totalorder %s12, 7
    %p212 = pnand %p210, %p211
    %p213 = pneg %p212
    // Predicated region
    $region9: #{_lambda_.7} parent=5 // pred_check
      _
    $region10: #{_lambda_.7} parent=5 // pred_check_branch
      %215 = sbr.rel (%p212) target = $region12
    $region11: #{_lambda_.7} parent=5 // pred_region
      %s216 = ssub.s32 %s12, 1
      // Predicated region
      $region13: #{_lambda_.7} parent=11 // pred_check
        %p217 = pneg %p101
      $region14: #{_lambda_.7} parent=11 // pred_check_branch
        %219 = sbr.rel (%p217) target = $region16
      $region15: #{_lambda_.7} parent=11 // pred_region
        _
      $region16: #{_lambda_.7} parent=11 // pred_fallthru
        _
      // Predicated region
      $region17: #{_lambda_.7} parent=11 // pred_check
        %p220 = pneg %p122
      $region18: #{_lambda_.7} parent=11 // pred_check_branch
        %222 = sbr.rel (%p220) target = $region20
      $region19: #{_lambda_.7} parent=11 // pred_region
        _
      $region20: #{_lambda_.7} parent=11 // pred_fallthru
        _
    $region12: #{_lambda_.7} parent=5 // pred_fallthru
      _
    %p223 = scmp.lt.s32.totalorder %s12, 6
    // Predicated region
    $region21: #{_lambda_.7} parent=5 // pred_check
      %p224 = pneg %p223
    $region22: #{_lambda_.7} parent=5 // pred_check_branch
      %226 = sbr.rel (%p224) target = $region24
    $region23: #{_lambda_.7} parent=5 // pred_region
      // Predicated region
      $region25: #{_lambda_.7} parent=23 // pred_check
        %p227 = pneg %p46
      $region26: #{_lambda_.7} parent=23 // pred_check_branch
        %229 = sbr.rel (%p227) target = $region28
      $region27: #{_lambda_.7} parent=23 // pred_region
        %s230 = smul.u32 8, %s20
        %p231 = scmp.lt.s32.totalorder %s19, 1
        %s232 = scalar_select %p231, %s19, 1
        %p233 = scmp.lt.s32.totalorder %s230, 23
        %s234 = scalar_select %p233, %s230, 23
        %s235 = smul.addr %s232, 24
        %s236 = sadd.s32 %s234, %s235
        %s237 = smul.addr %s236, 8
        %s238 = scalar_lea.vmem %s0, %s237
        %s239 = smul.u32 8, %s20
      $region28: #{_lambda_.7} parent=23 // pred_fallthru
        _
      // Predicated region
      $region29: #{_lambda_.7} parent=23 // pred_check
        %p240 = pneg %p74
      $region30: #{_lambda_.7} parent=23 // pred_check_branch
        %242 = sbr.rel (%p240) target = $region32
      $region31: #{_lambda_.7} parent=23 // pred_region
        %s243 = smul.u32 8, %s20
        %p244 = scmp.lt.s32.totalorder %s19, 1
        %s245 = scalar_select %p244, %s19, 1
        %p246 = scmp.lt.s32.totalorder %s243, 23
        %s247 = scalar_select %p246, %s243, 23
        %s248 = smul.addr %s245, 24
        %s249 = sadd.s32 %s247, %s248
        %s250 = smul.addr %s249, 8
        %s251 = scalar_lea.vmem %s1, %s250
        %s252 = smul.u32 8, %s20
      $region32: #{_lambda_.7} parent=23 // pred_fallthru
        _
      // Predicated region
      $region33: #{_lambda_.7} parent=23 // pred_check
        %p253 = pneg %p142
      $region34: #{_lambda_.7} parent=23 // pred_check_branch
        %255 = sbr.rel (%p253) target = $region36
      $region35: #{_lambda_.7} parent=23 // pred_region
        %p256 = scmp.lt.s32.totalorder %s19, 1
        %s257 = scalar_select %p256, %s19, 1
        %s258 = scalar_lea.vmem %s4, %s257
      $region36: #{_lambda_.7} parent=23 // pred_fallthru
        _
      // Predicated region
      $region37: #{_lambda_.7} parent=23 // pred_check
        %p259 = pneg %p168
      $region38: #{_lambda_.7} parent=23 // pred_check_branch
        %261 = sbr.rel (%p259) target = $region40
      $region39: #{_lambda_.7} parent=23 // pred_region
        %p262 = scmp.lt.s32.totalorder %s19, 1
        %s263 = scalar_select %p262, %s19, 1
        %s264 = scalar_lea.vmem %s5, %s263
      $region40: #{_lambda_.7} parent=23 // pred_fallthru
        _
    $region24: #{_lambda_.7} parent=5 // pred_fallthru
      _
    %p265 = scmp.le.s32.totalorder 1, %s12
    %p266 = scmp.lt.s32.totalorder %s12, 7
    %p267 = pnand %p265, %p266
    %p268 = pneg %p267
    // Predicated region
    $region41: #{_lambda_.7} parent=5 // pred_check
      _
    $region42: #{_lambda_.7} parent=5 // pred_check_branch
      %270 = sbr.rel (%p267) target = $region44
    $region43: #{_lambda_.7} parent=5 // pred_region
      %s271 = ssub.s32 %s12, 1
      %s272 = smul.u32 8, %s22
      %p273 = scmp.lt.s32.totalorder %s21, 1
      %s274 = scalar_select %p273, %s21, 1
      %p275 = scmp.lt.s32.totalorder %s272, 23
      %s276 = scalar_select %p275, %s272, 23
      %s277 = smul.addr %s274, 24
      %s278 = sadd.s32 %s276, %s277
      %s279 = smul.addr %s278, 8
      %s280 = scalar_lea.vmem %s0, %s279
      %p281 = pneg %p52
      %p282 = pneg %p49
      %s283 = smul.u32 8, %s22
      %p284 = scmp.lt.s32.totalorder %s21, 1
      %s285 = scalar_select %p284, %s21, 1
      %p286 = scmp.lt.s32.totalorder %s283, 23
      %s287 = scalar_select %p286, %s283, 23
      %s288 = smul.addr %s285, 24
      %s289 = sadd.s32 %s287, %s288
      %s290 = smul.addr %s289, 8
      %s291 = scalar_lea.vmem %s1, %s290
      %p292 = pneg %p80
      %p293 = pneg %p77
      %p294 = pneg %p101
      %p295 = pneg %p98
      %p296 = pneg %p122
      %p297 = pneg %p119
      %p298 = scmp.lt.s32.totalorder %s21, 1
      %s299 = scalar_select %p298, %s21, 1
      %s300 = scalar_lea.vmem %s4, %s299
      %p301 = pneg %p148
      %p302 = pneg %p145
      %p303 = scmp.lt.s32.totalorder %s21, 1
      %s304 = scalar_select %p303, %s21, 1
      %s305 = scalar_lea.vmem %s5, %s304
      %p306 = pneg %p174
      %p307 = pneg %p171
      %p308 = pneg %p202
      %p309 = pneg %p199
      %s310 = smul.u32 8, %s22
      %p311 = scmp.lt.s32.totalorder %s21, 1
      %s312 = scalar_select %p311, %s21, 1
      %p313 = scmp.lt.s32.totalorder %s310, 23
      %s314 = scalar_select %p313, %s310, 23
      %s315 = smul.addr %s312, 24
      %s316 = sadd.s32 %s314, %s315
      %s317 = smul.addr %s316, 8
      %s318 = scalar_lea.vmem %s6, %s317
      %s319 = smul.u32 8, %s22
      %p320 = scmp.lt.s32.totalorder %s21, 1
      %s321 = scalar_select %p320, %s21, 1
      %p322 = scmp.lt.s32.totalorder %s319, 23
      %s323 = scalar_select %p322, %s319, 23
      %s324 = smul.addr %s321, 24
      %s325 = sadd.s32 %s323, %s324
      %s326 = smul.addr %s325, 8
      %s327 = scalar_lea.vmem %s0, %s326
      %s328 = smul.u32 8, %s22
      %s329 = smul.u32 8, %s22
      %p330 = scmp.lt.s32.totalorder %s21, 1
      %s331 = scalar_select %p330, %s21, 1
      %p332 = scmp.lt.s32.totalorder %s329, 23
      %s333 = scalar_select %p332, %s329, 23
      %s334 = smul.addr %s331, 24
      %s335 = sadd.s32 %s333, %s334
      %s336 = smul.addr %s335, 8
      %s337 = scalar_lea.vmem %s1, %s336
      %s338 = smul.u32 8, %s22
      %p339 = scmp.lt.s32.totalorder %s21, 1
      %s340 = scalar_select %p339, %s21, 1
      %s341 = scalar_lea.vmem %s4, %s340
      %p342 = scmp.lt.s32.totalorder %s21, 1
      %s343 = scalar_select %p342, %s21, 1
      %s344 = scalar_lea.vmem %s5, %s343
      %s345 = smul.u32 8, %s22
      %p346 = scmp.lt.s32.totalorder %s21, 1
      %s347 = scalar_select %p346, %s21, 1
      %p348 = scmp.lt.s32.totalorder %s345, 23
      %s349 = scalar_select %p348, %s345, 23
      %s350 = smul.addr %s347, 24
      %s351 = sadd.s32 %s349, %s350
      %s352 = smul.addr %s351, 8
      %s353 = scalar_lea.vmem %s6, %s352
      %s354 = smul.u32 8, %s22
      %v355 = vld [vmem:[%s327] sm:$0xff]
      %v356 = vld [vmem:[%s327 + $0x8] sm:$0xff]
      %v357 = vld [vmem:[%s327 + $0x10] sm:$0xff]
      %v358 = vld [vmem:[%s327 + $0x18] sm:$0xff]
      %v359 = vld [vmem:[%s327 + $0x20] sm:$0xff]
      %v360 = vld [vmem:[%s327 + $0x28] sm:$0xff]
      %v361 = vld [vmem:[%s327 + $0x30] sm:$0xff]
      %v362 = vld [vmem:[%s327 + $0x38] sm:$0xff]
      %v363 = vld [vmem:[%s341] sm:$0x1]
      %v364 = vld [vmem:[%s344] sm:$0x1]
      %v366 = vlaneseq
      %v367 = vshrl.u32 %v366, 7
      %v368 = vsub.s32 0, %v367
      %v369 = vrot.slane %v363, %v368
      %370 = vset.pattern.permute.xlu0 0
      %371 = vperm.xlu0 %370, %v369
      %v372 = vpop.permute.xlu0 %371
      %v374 = vsub.f32 %v355, %v372
      %v375 = vsub.f32 %v356, %v372
      %v376 = vsub.f32 %v357, %v372
      %v377 = vsub.f32 %v358, %v372
      %v378 = vsub.f32 %v359, %v372
      %v379 = vsub.f32 %v360, %v372
      %v380 = vsub.f32 %v361, %v372
      %v381 = vsub.f32 %v362, %v372
      %v383 = vlaneseq
      %v384 = vshrl.u32 %v383, 7
      %v385 = vsub.s32 0, %v384
      %v386 = vrot.slane %v364, %v385
      %387 = vset.pattern.permute.xlu0 0
      %388 = vperm.xlu0 %387, %v386
      %v389 = vpop.permute.xlu0 %388
      %v391 = vmul.f32 %v374, %v389
      %v392 = vmul.f32 %v375, %v389
      %v393 = vmul.f32 %v376, %v389
      %v394 = vmul.f32 %v377, %v389
      %v395 = vmul.f32 %v378, %v389
      %v396 = vmul.f32 %v379, %v389
      %v397 = vmul.f32 %v380, %v389
      %v398 = vmul.f32 %v381, %v389
      %v399 = vld [vmem:[%s2] sm:$0x1]
      %v401 = vlaneseq
      %v402 = vshrl.u32 %v401, 7
      %v403 = vsub.s32 0, %v402
      %v404 = vrot.slane %v399, %v403
      %v406 = vmul.f32 %v391, %v404
      %v407 = vmul.f32 %v392, %v404
      %v408 = vmul.f32 %v393, %v404
      %v409 = vmul.f32 %v394, %v404
      %v410 = vmul.f32 %v395, %v404
      %v411 = vmul.f32 %v396, %v404
      %v412 = vmul.f32 %v397, %v404
      %v413 = vmul.f32 %v398, %v404
      %v414 = vld [vmem:[%s3] sm:$0x1]
      %v416 = vlaneseq
      %v417 = vshrl.u32 %v416, 7
      %v418 = vsub.s32 0, %v417
      %v419 = vrot.slane %v414, %v418
      %v421 = vadd.f32 %v406, %v419
      %v422 = vadd.f32 %v407, %v419
      %v423 = vadd.f32 %v408, %v419
      %v424 = vadd.f32 %v409, %v419
      %v425 = vadd.f32 %v410, %v419
      %v426 = vadd.f32 %v411, %v419
      %v427 = vadd.f32 %v412, %v419
      %v428 = vadd.f32 %v413, %v419
      %v429 = vld [vmem:[%s337] sm:$0xff]
      %v430 = vld [vmem:[%s337 + $0x8] sm:$0xff]
      %v431 = vld [vmem:[%s337 + $0x10] sm:$0xff]
      %v432 = vld [vmem:[%s337 + $0x18] sm:$0xff]
      %v433 = vld [vmem:[%s337 + $0x20] sm:$0xff]
      %v434 = vld [vmem:[%s337 + $0x28] sm:$0xff]
      %v435 = vld [vmem:[%s337 + $0x30] sm:$0xff]
      %v436 = vld [vmem:[%s337 + $0x38] sm:$0xff]
      %v437 = vadd.f32 %v421, %v429
      %v438 = vadd.f32 %v422, %v430
      %v439 = vadd.f32 %v423, %v431
      %v440 = vadd.f32 %v424, %v432
      %v441 = vadd.f32 %v425, %v433
      %v442 = vadd.f32 %v426, %v434
      %v443 = vadd.f32 %v427, %v435
      %v444 = vadd.f32 %v428, %v436
      %445 = vst [vmem:[%s353] sm:$0xff] %v437
      %446 = vst [vmem:[%s353 + $0x8] sm:$0xff] %v438
      %447 = vst [vmem:[%s353 + $0x10] sm:$0xff] %v439
      %448 = vst [vmem:[%s353 + $0x18] sm:$0xff] %v440
      %449 = vst [vmem:[%s353 + $0x20] sm:$0xff] %v441
      %450 = vst [vmem:[%s353 + $0x28] sm:$0xff] %v442
      %451 = vst [vmem:[%s353 + $0x30] sm:$0xff] %v443
      %452 = vst [vmem:[%s353 + $0x38] sm:$0xff] %v444
      %s453 = smul.u32 8, %s22
      %p454 = scmp.lt.s32.totalorder %s21, 1
      %s455 = scalar_select %p454, %s21, 1
      %p456 = scmp.lt.s32.totalorder %s453, 23
      %s457 = scalar_select %p456, %s453, 23
      %s458 = smul.addr %s455, 24
      %s459 = sadd.s32 %s457, %s458
      %s460 = smul.addr %s459, 8
      %s461 = scalar_lea.vmem %s6, %s460
      // Predicated region
      $region45: #{_lambda_.7} parent=43 // pred_check
        %p462 = pneg %p199
      $region46: #{_lambda_.7} parent=43 // pred_check_branch
        %464 = sbr.rel (%p462) target = $region48
      $region47: #{_lambda_.7} parent=43 // pred_region
        %s465 = smul.u32 8, %s22
      $region48: #{_lambda_.7} parent=43 // pred_fallthru
        _
    $region44: #{_lambda_.7} parent=5 // pred_fallthru
      _
    %p466 = scmp.le.s32.totalorder 2, %s12
    // Predicated region
    $region49: #{_lambda_.7} parent=5 // pred_check
      %p467 = pneg %p466
    $region50: #{_lambda_.7} parent=5 // pred_check_branch
      %469 = sbr.rel (%p467) target = $region52
    $region51: #{_lambda_.7} parent=5 // pred_region
      %s470 = ssub.s32 %s12, 2
      // Predicated region
      $region53: #{_lambda_.7} parent=51 // pred_check
        %p471 = pneg %p205
      $region54: #{_lambda_.7} parent=51 // pred_check_branch
        %473 = sbr.rel (%p471) target = $region56
      $region55: #{_lambda_.7} parent=51 // pred_region
        %s474 = smul.u32 8, %s24
        %p475 = scmp.lt.s32.totalorder %s23, 1
        %s476 = scalar_select %p475, %s23, 1
        %p477 = scmp.lt.s32.totalorder %s474, 23
        %s478 = scalar_select %p477, %s474, 23
        %s479 = smul.addr %s476, 24
        %s480 = sadd.s32 %s478, %s479
        %s481 = smul.addr %s480, 8
        %s482 = scalar_lea.vmem %s6, %s481
      $region56: #{_lambda_.7} parent=51 // pred_fallthru
        _
    $region52: #{_lambda_.7} parent=5 // pred_fallthru
      _
  $region6: #{_lambda_.7} parent=0 // loop_footer
    %s16 = sadd.s32 1, %s12
  $region7: #{_lambda_.7} parent=0 // loop_footer_branch
    %11 = sbr.rel target = $region3
  $region8: #{_lambda_.7} parent=0 // loop_exit
    _

</llo_original>
